<compile_context>
chip_gen: v5e
topology: v5e:2x2
jax: 0.10.0
libtpu: 0.0.40
codegen_flags: <defaults>
</compile_context>

<pallas_src>
import math
import functools

import jax
import jax.numpy as jnp
from jax.experimental import pallas as pl
from jax.experimental.pallas import tpu as pltpu


def _erf(x):
    """Abramowitz & Stegun 7.1.26 erf approximation (max abs error ~1.5e-7)."""
    p = 0.3275911
    a1, a2, a3, a4, a5 = (0.254829592, -0.284496736, 1.421413741,
                          -1.453152027, 1.061405429)
    ax = jnp.abs(x)
    t = 1.0 / (1.0 + p * ax)
    poly = ((((a5 * t + a4) * t + a3) * t + a2) * t + a1) * t
    y = 1.0 - poly * jnp.exp(-ax * ax)
    return jnp.where(x >= 0, y, -y)


def _gelu_exact(x):
    # Matches torch.nn.GELU() (erf-based, non-approximate).
    return 0.5 * x * (1.0 + _erf(x * (1.0 / math.sqrt(2.0))))


def transformer_layer_kernel(
    x_ref, mask_ref,
    wq_ref, bq_ref, wk_ref, bk_ref, wv_ref, bv_ref,
    wo_ref, bo_ref, ln1g_ref, ln1b_ref,
    w1_ref, b1_ref, w2_ref, b2_ref, ln2g_ref, ln2b_ref,
    out_ref, probs_ref,
    acc_ref,
    *, scale):
    h = pl.program_id(1)
    nh = pl.num_programs(1)

    @pl.when(h == 0)
    def _init():
        acc_ref[...] = jnp.zeros_like(acc_ref)

    x = x_ref[0]                           # (S, H) float32 (kept for residual)
    x_bf = x.astype(jnp.bfloat16)          # MXU operand
    mask = mask_ref[0]                     # (1, S) -> broadcasts over query rows

    # --- this head's Q/K/V projections (bf16 MXU operands, f32 accumulation) ---
    q = jnp.dot(x_bf, wq_ref[0], preferred_element_type=jnp.float32) + bq_ref[0]
    k = jnp.dot(x_bf, wk_ref[0], preferred_element_type=jnp.float32) + bk_ref[0]
    v = jnp.dot(x_bf, wv_ref[0], preferred_element_type=jnp.float32) + bv_ref[0]

    # --- scores: contract the head dim directly (no kh.T relayout) ---
    s = jax.lax.dot_general(
        q.astype(jnp.bfloat16), k.astype(jnp.bfloat16),
        dimension_numbers=(((1,), (1,)), ((), ())),
        preferred_element_type=jnp.float32) * scale
    s = s + mask
    s = s - jnp.max(s, axis=-1, keepdims=True)
    e = jnp.exp(s)
    p = e * pl.reciprocal(jnp.sum(e, axis=-1, keepdims=True), approx=True)
    probs_ref[0, 0] = p                    # (S, S) probs for this (batch, head)

    # --- context for this head and its Wo contribution (lane-dense accumulate) ---
    ctx = jnp.dot(p.astype(jnp.bfloat16), v.astype(jnp.bfloat16),
                  preferred_element_type=jnp.float32)            # (S, hs)
    acc_ref[...] += jnp.dot(ctx.astype(jnp.bfloat16), wo_ref[0],
                            preferred_element_type=jnp.float32)  # (S, H)

    # --- finalize once per batch element: bias + residual + LN1 + FFN + LN2 ---
    @pl.when(h == nh - 1)
    def _finalize():
        # TODO(synk): dropout implemented as identity (eval-mode); training dropout omitted.
        attn = acc_ref[...] + bo_ref[...]
        res1 = attn + x
        mu1 = jnp.mean(res1, axis=-1, keepdims=True)
        var1 = jnp.mean((res1 - mu1) ** 2, axis=-1, keepdims=True)
        h1 = (res1 - mu1) * jax.lax.rsqrt(var1 + 1e-12) * ln1g_ref[...] + ln1b_ref[...]

        inter = jnp.dot(h1.astype(jnp.bfloat16), w1_ref[...],
                        preferred_element_type=jnp.float32) + b1_ref[...]
        inter = _gelu_exact(inter)
        o = jnp.dot(inter.astype(jnp.bfloat16), w2_ref[...],
                    preferred_element_type=jnp.float32) + b2_ref[...]
        res2 = o + h1
        mu2 = jnp.mean(res2, axis=-1, keepdims=True)
        var2 = jnp.mean((res2 - mu2) ** 2, axis=-1, keepdims=True)
        out_ref[0] = (res2 - mu2) * jax.lax.rsqrt(var2 + 1e-12) * ln2g_ref[...] + ln2b_ref[...]


def transformer_layer(x, mask, params, num_heads):
    B, S, H = x.shape
    I = params["w1"].shape[1]
    NH = num_heads
    hs = H // NH
    scale = 1.0 / math.sqrt(hs)
    bf16 = jnp.bfloat16

    # Head-major weight layouts (one-time layout plumbing outside the kernel).
    def split_cols(w):   # (H, H) -> (NH, H, hs): per-head output columns
        return w.reshape(H, NH, hs).transpose(1, 0, 2)

    def split_rows(w):   # (H, H) -> (NH, hs, H): per-head input rows
        return w.reshape(NH, hs, H)

    wq_h = split_cols(params["wq"]).astype(bf16)
    wk_h = split_cols(params["wk"]).astype(bf16)
    wv_h = split_cols(params["wv"]).astype(bf16)
    wo_h = split_rows(params["wo"]).astype(bf16)
    bq_h = params["bq"].reshape(NH, 1, hs)
    bk_h = params["bk"].reshape(NH, 1, hs)
    bv_h = params["bv"].reshape(NH, 1, hs)
    w1 = params["w1"].astype(bf16)
    w2 = params["w2"].astype(bf16)

    per_head = lambda b, h: (h, 0, 0)
    per_batch = lambda b, h: (b, 0, 0)
    const2 = lambda b, h: (0, 0)

    in_specs = [
        pl.BlockSpec((1, S, H), per_batch),        # x
        pl.BlockSpec((1, 1, S), per_batch),        # mask
        pl.BlockSpec((1, H, hs), per_head),        # Wq (head slice)
        pl.BlockSpec((1, 1, hs), per_head),        # bq
        pl.BlockSpec((1, H, hs), per_head),        # Wk
        pl.BlockSpec((1, 1, hs), per_head),        # bk
        pl.BlockSpec((1, H, hs), per_head),        # Wv
        pl.BlockSpec((1, 1, hs), per_head),        # bv
        pl.BlockSpec((1, hs, H), per_head),        # Wo (head slice of rows)
        pl.BlockSpec((1, H), const2),              # bo
        pl.BlockSpec((1, H), const2),              # ln1 gamma
        pl.BlockSpec((1, H), const2),              # ln1 beta
        pl.BlockSpec((H, I), const2),              # W1
        pl.BlockSpec((1, I), const2),              # b1
        pl.BlockSpec((I, H), const2),              # W2
        pl.BlockSpec((1, H), const2),              # b2
        pl.BlockSpec((1, H), const2),              # ln2 gamma
        pl.BlockSpec((1, H), const2),              # ln2 beta
    ]
    out_specs = [
        pl.BlockSpec((1, S, H), per_batch),
        pl.BlockSpec((1, 1, S, S), lambda b, h: (b, h, 0, 0)),
    ]
    out_shape = [
        jax.ShapeDtypeStruct((B, S, H), jnp.float32),
        jax.ShapeDtypeStruct((B, NH, S, S), jnp.float32),
    ]

    # Rough scoped-VMEM estimate (double-buffered blocks + scratch) with headroom.
    def nb(shape, dt):
        n = 1
        for d in shape:
            n *= d
        return n * jnp.dtype(dt).itemsize

    est = (2 * (nb((1, S, H), jnp.float32) + nb((1, 1, S), jnp.float32)
                + 3 * (nb((1, H, hs), bf16) + nb((1, 1, hs), jnp.float32))
                + nb((1, hs, H), bf16)
                + nb((H, I), bf16) + nb((I, H), bf16)
                + 6 * nb((1, H), jnp.float32) + nb((1, I), jnp.float32)
                + nb((1, S, H), jnp.float32) + nb((1, 1, S, S), jnp.float32))
           + nb((S, H), jnp.float32))
    vmem_limit = int(min(max(2 * est, 32 * 1024 * 1024), 64 * 1024 * 1024))

    kernel = functools.partial(transformer_layer_kernel, scale=scale)

    return pl.pallas_call(
        kernel,
        out_shape=out_shape,
        grid_spec=pltpu.PrefetchScalarGridSpec(
            num_scalar_prefetch=0,
            grid=(B, NH),                       # head axis last (reduction)
            in_specs=in_specs,
            out_specs=out_specs,
            scratch_shapes=[pltpu.VMEM((S, H), jnp.float32)],   # Wo accumulator
        ),
        compiler_params=pltpu.CompilerParams(
            dimension_semantics=("parallel", "arbitrary"),
            vmem_limit_bytes=vmem_limit),
    )(
        x, mask,
        wq_h, bq_h, wk_h, bk_h, wv_h, bv_h,
        wo_h, params["bo"], params["ln1_g"], params["ln1_b"],
        w1, params["b1"], w2, params["b2"],
        params["ln2_g"], params["ln2_b"],
    )


def reference_transformer_layer(x, mask, params, num_heads):
    """Pure-JAX float32 reference (eval-mode dropout) for correctness checking."""
    B, S, H = x.shape
    head_size = H // num_heads
    hp = jax.lax.Precision.HIGHEST

    q = jnp.einsum("bsh,hd->bsd", x, params["wq"], precision=hp) + params["bq"]
    k = jnp.einsum("bsh,hd->bsd", x, params["wk"], precision=hp) + params["bk"]
    v = jnp.einsum("bsh,hd->bsd", x, params["wv"], precision=hp) + params["bv"]

    def split(t):
        return t.reshape(B, S, num_heads, head_size).transpose(0, 2, 1, 3)

    qh, kh, vh = split(q), split(k), split(v)
    scores = jnp.einsum("bhqd,bhkd->bhqk", qh, kh, precision=hp) / math.sqrt(head_size)
    scores = scores + mask[:, None, :, :]          # (B,1,S) -> (B,1,1,S)
    probs = jax.nn.softmax(scores, axis=-1)
    ctx = jnp.einsum("bhqk,bhkd->bhqd", probs, vh, precision=hp)
    ctx = ctx.transpose(0, 2, 1, 3).reshape(B, S, H)

    attn = jnp.einsum("bsh,hd->bsd", ctx, params["wo"], precision=hp) + params["bo"]

    def layernorm(t, g, b):
        mu = jnp.mean(t, axis=-1, keepdims=True)
        var = jnp.mean((t - mu) ** 2, axis=-1, keepdims=True)
        return (t - mu) * jax.lax.rsqrt(var + 1e-12) * g + b

    h1 = layernorm(attn + x, params["ln1_g"], params["ln1_b"])
    inter = jax.nn.gelu(
        jnp.einsum("bsh,hi->bsi", h1, params["w1"], precision=hp) + params["b1"],
        approximate=False)
    o = jnp.einsum("bsi,ih->bsh", inter, params["w2"], precision=hp) + params["b2"]
    out = layernorm(o + h1, params["ln2_g"], params["ln2_b"])
    return out, probs


if __name__ == "__main__":
    B, S, H, NH, I = 2, 8, 32, 4, 64

    key = jax.random.PRNGKey(0)
    ks = jax.random.split(key, 16)

    def w(k, shape, scale=0.05):
        return (scale * jax.random.normal(k, shape)).astype(jnp.float32)

    params = {
        "wq": w(ks[0], (H, H)), "bq": w(ks[1], (1, H)),
        "wk": w(ks[2], (H, H)), "bk": w(ks[3], (1, H)),
        "wv": w(ks[4], (H, H)), "bv": w(ks[5], (1, H)),
        "wo": w(ks[6], (H, H)), "bo": w(ks[7], (1, H)),
        "ln1_g": jnp.ones((1, H), jnp.float32),
        "ln1_b": jnp.zeros((1, H), jnp.float32),
        "w1": w(ks[8], (H, I)), "b1": w(ks[9], (1, I)),
        "w2": w(ks[10], (I, H)), "b2": w(ks[11], (1, H)),
        "ln2_g": jnp.ones((1, H), jnp.float32),
        "ln2_b": jnp.zeros((1, H), jnp.float32),
    }

    x = jax.random.normal(ks[12], (B, S, H), dtype=jnp.float32)
    # Attention mask: batch 0 attends to all positions; batch 1 masks the last
    # two key positions (value -10000.0, matching the PyTorch convention).
    pos = jnp.arange(S)[None, None, :]                      # (1,1,S)
    valid_len = jnp.array([S, S - 2])[:, None, None]        # (B,1,1)
    mask = jnp.where(pos < valid_len, 0.0, -10000.0).astype(jnp.float32)  # (B,1,S)

    out, probs = transformer_layer(x, mask, params, NH)
    out = jax.block_until_ready(out)
    probs = jax.block_until_ready(probs)

    ref_out, ref_probs = reference_transformer_layer(x, mask, params, NH)
    assert out.shape == (B, S, H)
    assert probs.shape == (B, NH, S, S)
    # Tolerance relaxed vs. the pure-f32 reference because matmul operands are
    # bfloat16 (f32 accumulation) and softmax uses the approximate reciprocal.
    assert jnp.allclose(out, ref_out, atol=2e-2, rtol=2e-2)
    assert jnp.allclose(probs, ref_probs, atol=2e-2, rtol=2e-2)

    print("KERNEL_OK")
</pallas_src>

<mosaic_0001>
module attributes {stable_mosaic.version = 11 : i64} {
  func.func @transformer_layer_kernel(%arg0: i32, %arg1: i32, %arg2: memref<1x8x32xf32, #tpu.memory_space<vmem>>, %arg3: memref<1x1x8xf32, #tpu.memory_space<vmem>>, %arg4: memref<1x32x8xbf16, #tpu.memory_space<vmem>>, %arg5: memref<1x1x8xf32, #tpu.memory_space<vmem>>, %arg6: memref<1x32x8xbf16, #tpu.memory_space<vmem>>, %arg7: memref<1x1x8xf32, #tpu.memory_space<vmem>>, %arg8: memref<1x32x8xbf16, #tpu.memory_space<vmem>>, %arg9: memref<1x1x8xf32, #tpu.memory_space<vmem>>, %arg10: memref<1x8x32xbf16, #tpu.memory_space<vmem>>, %arg11: memref<1x32xf32, #tpu.memory_space<vmem>>, %arg12: memref<1x32xf32, #tpu.memory_space<vmem>>, %arg13: memref<1x32xf32, #tpu.memory_space<vmem>>, %arg14: memref<32x64xbf16, #tpu.memory_space<vmem>>, %arg15: memref<1x64xf32, #tpu.memory_space<vmem>>, %arg16: memref<64x32xbf16, #tpu.memory_space<vmem>>, %arg17: memref<1x32xf32, #tpu.memory_space<vmem>>, %arg18: memref<1x32xf32, #tpu.memory_space<vmem>>, %arg19: memref<1x32xf32, #tpu.memory_space<vmem>>, %arg20: memref<1x8x32xf32, #tpu.memory_space<vmem>>, %arg21: memref<1x1x8x8xf32, #tpu.memory_space<vmem>>, %arg22: memref<8x32xf32, #tpu.memory_space<vmem>>) attributes {dimension_semantics = [#tpu.dimension_semantics<parallel>, #tpu.dimension_semantics<arbitrary>], iteration_bounds = array<i64: 2, 4>, scalar_prefetch = 0 : i64, scratch_operands = 1 : i64, tpu.core_type = #tpu.core_type<tc>, window_params = [{transform_indices = @transform_0, window_bounds = array<i64: 1, 8, 32>}, {transform_indices = @transform_1, window_bounds = array<i64: 1, 1, 8>}, {transform_indices = @transform_2, window_bounds = array<i64: 1, 32, 8>}, {transform_indices = @transform_3, window_bounds = array<i64: 1, 1, 8>}, {transform_indices = @transform_4, window_bounds = array<i64: 1, 32, 8>}, {transform_indices = @transform_5, window_bounds = array<i64: 1, 1, 8>}, {transform_indices = @transform_6, window_bounds = array<i64: 1, 32, 8>}, {transform_indices = @transform_7, window_bounds = array<i64: 1, 1, 8>}, {transform_indices = @transform_8, window_bounds = array<i64: 1, 8, 32>}, {pipeline_mode = #tpu.pipeline_mode<synchronous>, transform_indices = @transform_9, window_bounds = array<i64: 1, 32>}, {pipeline_mode = #tpu.pipeline_mode<synchronous>, transform_indices = @transform_10, window_bounds = array<i64: 1, 32>}, {pipeline_mode = #tpu.pipeline_mode<synchronous>, transform_indices = @transform_11, window_bounds = array<i64: 1, 32>}, {pipeline_mode = #tpu.pipeline_mode<synchronous>, transform_indices = @transform_12, window_bounds = array<i64: 32, 64>}, {pipeline_mode = #tpu.pipeline_mode<synchronous>, transform_indices = @transform_13, window_bounds = array<i64: 1, 64>}, {pipeline_mode = #tpu.pipeline_mode<synchronous>, transform_indices = @transform_14, window_bounds = array<i64: 64, 32>}, {pipeline_mode = #tpu.pipeline_mode<synchronous>, transform_indices = @transform_15, window_bounds = array<i64: 1, 32>}, {pipeline_mode = #tpu.pipeline_mode<synchronous>, transform_indices = @transform_16, window_bounds = array<i64: 1, 32>}, {pipeline_mode = #tpu.pipeline_mode<synchronous>, transform_indices = @transform_17, window_bounds = array<i64: 1, 32>}, {transform_indices = @transform_18, window_bounds = array<i64: 1, 8, 32>}, {transform_indices = @transform_19, window_bounds = array<i64: 1, 1, 8, 8>}]} {
    %c0_i32 = arith.constant 0 : i32
    %0 = arith.cmpi eq, %arg1, %c0_i32 : i32
    %1 = arith.extui %0 : i1 to i32
    %c0_i32_0 = arith.constant 0 : i32
    %2 = arith.cmpi ne, %1, %c0_i32_0 : i32
    scf.if %2 {
      %cst_44 = arith.constant 0.000000e+00 : f32
      %62 = vector.broadcast %cst_44 : f32 to vector<8x32xf32>
      %c0_45 = arith.constant 0 : index
      %c0_46 = arith.constant 0 : index
      %63 = vector.load %arg22[%c0_45, %c0_46] : memref<8x32xf32, #tpu.memory_space<vmem>>, vector<8x32xf32>
      tpu.vector_store %arg22[%c0_45, %c0_46], %62 {strides = array<i32>} : memref<8x32xf32, #tpu.memory_space<vmem>>, vector<8x32xf32>,
    } else {
    }
    %c0 = arith.constant 0 : index
    %c0_1 = arith.constant 0 : index
    %c0_2 = arith.constant 0 : index
    %3 = vector.load %arg2[%c0, %c0_1, %c0_2] : memref<1x8x32xf32, #tpu.memory_space<vmem>>, vector<1x8x32xf32>
    %4 = vector.shape_cast %3 : vector<1x8x32xf32> to vector<8x32xf32>
    %5 = arith.truncf %4 : vector<8x32xf32> to vector<8x32xbf16>
    %c0_3 = arith.constant 0 : index
    %c0_4 = arith.constant 0 : index
    %c0_5 = arith.constant 0 : index
    %6 = vector.load %arg3[%c0_3, %c0_4, %c0_5] : memref<1x1x8xf32, #tpu.memory_space<vmem>>, vector<1x1x8xf32>
    %7 = vector.shape_cast %6 : vector<1x1x8xf32> to vector<1x8xf32>
    %c0_6 = arith.constant 0 : index
    %c0_7 = arith.constant 0 : index
    %c0_8 = arith.constant 0 : index
    %8 = vector.load %arg4[%c0_6, %c0_7, %c0_8] : memref<1x32x8xbf16, #tpu.memory_space<vmem>>, vector<1x32x8xbf16>
    %9 = vector.shape_cast %8 : vector<1x32x8xbf16> to vector<32x8xbf16>
    %cst = arith.constant dense<0.000000e+00> : vector<8x8xf32>
    %10 = tpu.matmul %5, %9, %cst {dimension_numbers = #tpu.dot_dimension_numbers<[1], [0], [0], [1], [0, 0, 1, 1], [], []>} : vector<8x32xbf16>, vector<32x8xbf16>, vector<8x8xf32> -> vector<8x8xf32>
    %c0_9 = arith.constant 0 : index
    %c0_10 = arith.constant 0 : index
    %c0_11 = arith.constant 0 : index
    %11 = vector.load %arg5[%c0_9, %c0_10, %c0_11] : memref<1x1x8xf32, #tpu.memory_space<vmem>>, vector<1x1x8xf32>
    %12 = vector.shape_cast %11 : vector<1x1x8xf32> to vector<1x8xf32>
    %13 = vector.broadcast %12 : vector<1x8xf32> to vector<8x8xf32>
    %14 = arith.addf %10, %13 : vector<8x8xf32>
    %c0_12 = arith.constant 0 : index
    %c0_13 = arith.constant 0 : index
    %c0_14 = arith.constant 0 : index
    %15 = vector.load %arg6[%c0_12, %c0_13, %c0_14] : memref<1x32x8xbf16, #tpu.memory_space<vmem>>, vector<1x32x8xbf16>
    %16 = vector.shape_cast %15 : vector<1x32x8xbf16> to vector<32x8xbf16>
    %cst_15 = arith.constant dense<0.000000e+00> : vector<8x8xf32>
    %17 = tpu.matmul %5, %16, %cst_15 {dimension_numbers = #tpu.dot_dimension_numbers<[1], [0], [0], [1], [0, 0, 1, 1], [], []>} : vector<8x32xbf16>, vector<32x8xbf16>, vector<8x8xf32> -> vector<8x8xf32>
    %c0_16 = arith.constant 0 : index
    %c0_17 = arith.constant 0 : index
    %c0_18 = arith.constant 0 : index
    %18 = vector.load %arg7[%c0_16, %c0_17, %c0_18] : memref<1x1x8xf32, #tpu.memory_space<vmem>>, vector<1x1x8xf32>
    %19 = vector.shape_cast %18 : vector<1x1x8xf32> to vector<1x8xf32>
    %20 = vector.broadcast %19 : vector<1x8xf32> to vector<8x8xf32>
    %21 = arith.addf %17, %20 : vector<8x8xf32>
    %c0_19 = arith.constant 0 : index
    %c0_20 = arith.constant 0 : index
    %c0_21 = arith.constant 0 : index
    %22 = vector.load %arg8[%c0_19, %c0_20, %c0_21] : memref<1x32x8xbf16, #tpu.memory_space<vmem>>, vector<1x32x8xbf16>
    %23 = vector.shape_cast %22 : vector<1x32x8xbf16> to vector<32x8xbf16>
    %cst_22 = arith.constant dense<0.000000e+00> : vector<8x8xf32>
    %24 = tpu.matmul %5, %23, %cst_22 {dimension_numbers = #tpu.dot_dimension_numbers<[1], [0], [0], [1], [0, 0, 1, 1], [], []>} : vector<8x32xbf16>, vector<32x8xbf16>, vector<8x8xf32> -> vector<8x8xf32>
    %c0_23 = arith.constant 0 : index
    %c0_24 = arith.constant 0 : index
    %c0_25 = arith.constant 0 : index
    %25 = vector.load %arg9[%c0_23, %c0_24, %c0_25] : memref<1x1x8xf32, #tpu.memory_space<vmem>>, vector<1x1x8xf32>
    %26 = vector.shape_cast %25 : vector<1x1x8xf32> to vector<1x8xf32>
    %27 = vector.broadcast %26 : vector<1x8xf32> to vector<8x8xf32>
    %28 = arith.addf %24, %27 : vector<8x8xf32>
    %29 = arith.truncf %14 : vector<8x8xf32> to vector<8x8xbf16>
    %30 = arith.truncf %21 : vector<8x8xf32> to vector<8x8xbf16>
    %cst_26 = arith.constant dense<0.000000e+00> : vector<8x8xf32>
    %31 = tpu.matmul %29, %30, %cst_26 {dimension_numbers = #tpu.dot_dimension_numbers<[1], [1], [0], [0], [0, 0, 1, 0], [], []>} : vector<8x8xbf16>, vector<8x8xbf16>, vector<8x8xf32> -> vector<8x8xf32>
    %cst_27 = arith.constant 0.353553385 : f32
    %32 = vector.broadcast %cst_27 : f32 to vector<8x8xf32>
    %33 = arith.mulf %31, %32 : vector<8x8xf32>
    %34 = vector.broadcast %7 : vector<1x8xf32> to vector<8x8xf32>
    %35 = arith.addf %33, %34 : vector<8x8xf32>
    %cst_28 = arith.constant dense<0xFF800000> : vector<8xf32>
    %36 = vector.multi_reduction <maximumf>, %35, %cst_28 [1] : vector<8x8xf32> to vector<8xf32>
    %37 = vector.shape_cast %36 : vector<8xf32> to vector<8x1xf32>
    %38 = vector.broadcast %37 : vector<8x1xf32> to vector<8x8xf32>
    %39 = arith.subf %35, %38 : vector<8x8xf32>
    %40 = math.exp %39 : vector<8x8xf32>
    %cst_29 = arith.constant dense<0.000000e+00> : vector<8xf32>
    %41 = vector.multi_reduction <add>, %40, %cst_29 [1] : vector<8x8xf32> to vector<8xf32>
    %42 = vector.shape_cast %41 : vector<8xf32> to vector<8x1xf32>
    %43 = tpu.reciprocal %42 {approx = true} : vector<8x1xf32> -> vector<8x1xf32>
    %44 = vector.broadcast %43 : vector<8x1xf32> to vector<8x8xf32>
    %45 = arith.mulf %40, %44 : vector<8x8xf32>
    %c0_30 = arith.constant 0 : index
    %c0_31 = arith.constant 0 : index
    %c0_32 = arith.constant 0 : index
    %c0_33 = arith.constant 0 : index
    %46 = vector.load %arg21[%c0_30, %c0_31, %c0_32, %c0_33] : memref<1x1x8x8xf32, #tpu.memory_space<vmem>>, vector<1x1x8x8xf32>
    %47 = vector.shape_cast %46 : vector<1x1x8x8xf32> to vector<8x8xf32>
    %48 = vector.shape_cast %45 : vector<8x8xf32> to vector<1x1x8x8xf32>
    tpu.vector_store %arg21[%c0_30, %c0_31, %c0_32, %c0_33], %48 {strides = array<i32>} : memref<1x1x8x8xf32, #tpu.memory_space<vmem>>, vector<1x1x8x8xf32>,
    %49 = arith.truncf %45 : vector<8x8xf32> to vector<8x8xbf16>
    %50 = arith.truncf %28 : vector<8x8xf32> to vector<8x8xbf16>
    %cst_34 = arith.constant dense<0.000000e+00> : vector<8x8xf32>
    %51 = tpu.matmul %49, %50, %cst_34 {dimension_numbers = #tpu.dot_dimension_numbers<[1], [0], [0], [1], [0, 0, 1, 1], [], []>} : vector<8x8xbf16>, vector<8x8xbf16>, vector<8x8xf32> -> vector<8x8xf32>
    %c0_35 = arith.constant 0 : index
    %c0_36 = arith.constant 0 : index
    %52 = vector.load %arg22[%c0_35, %c0_36] : memref<8x32xf32, #tpu.memory_space<vmem>>, vector<8x32xf32>
    %53 = arith.truncf %51 : vector<8x8xf32> to vector<8x8xbf16>
    %c0_37 = arith.constant 0 : index
    %c0_38 = arith.constant 0 : index
    %c0_39 = arith.constant 0 : index
    %54 = vector.load %arg10[%c0_37, %c0_38, %c0_39] : memref<1x8x32xbf16, #tpu.memory_space<vmem>>, vector<1x8x32xbf16>
    %55 = vector.shape_cast %54 : vector<1x8x32xbf16> to vector<8x32xbf16>
    %cst_40 = arith.constant dense<0.000000e+00> : vector<8x32xf32>
    %56 = tpu.matmul %53, %55, %cst_40 {dimension_numbers = #tpu.dot_dimension_numbers<[1], [0], [0], [1], [0, 0, 1, 1], [], []>} : vector<8x8xbf16>, vector<8x32xbf16>, vector<8x32xf32> -> vector<8x32xf32>
    %57 = arith.addf %52, %56 : vector<8x32xf32>
    %c0_41 = arith.constant 0 : index
    %c0_42 = arith.constant 0 : index
    %58 = vector.load %arg22[%c0_41, %c0_42] : memref<8x32xf32, #tpu.memory_space<vmem>>, vector<8x32xf32>
    tpu.vector_store %arg22[%c0_41, %c0_42], %57 {strides = array<i32>} : memref<8x32xf32, #tpu.memory_space<vmem>>, vector<8x32xf32>,
    %c3_i32 = arith.constant 3 : i32
    %59 = arith.cmpi eq, %arg1, %c3_i32 : i32
    %60 = arith.extui %59 : i1 to i32
    %c0_i32_43 = arith.constant 0 : i32
    %61 = arith.cmpi ne, %60, %c0_i32_43 : i32
    scf.if %61 {
      %c0_44 = arith.constant 0 : index
      %c0_45 = arith.constant 0 : index
      %62 = vector.load %arg22[%c0_44, %c0_45] : memref<8x32xf32, #tpu.memory_space<vmem>>, vector<8x32xf32>
      %c0_46 = arith.constant 0 : index
      %c0_47 = arith.constant 0 : index
      %63 = vector.load %arg11[%c0_46, %c0_47] : memref<1x32xf32, #tpu.memory_space<vmem>>, vector<1x32xf32>
      %64 = vector.broadcast %63 : vector<1x32xf32> to vector<8x32xf32>
      %65 = arith.addf %62, %64 : vector<8x32xf32>
      %66 = arith.addf %65, %4 : vector<8x32xf32>
      %cst_48 = arith.constant dense<0.000000e+00> : vector<8xf32>
      %67 = vector.multi_reduction <add>, %66, %cst_48 [1] : vector<8x32xf32> to vector<8xf32>
      %68 = vector.shape_cast %67 : vector<8xf32> to vector<8x1xf32>
      %cst_49 = arith.constant 3.200000e+01 : f32
      %69 = vector.broadcast %cst_49 : f32 to vector<8x1xf32>
      %70 = arith.divf %68, %69 : vector<8x1xf32>
      %71 = vector.broadcast %70 : vector<8x1xf32> to vector<8x32xf32>
      %72 = arith.subf %66, %71 : vector<8x32xf32>
      %73 = arith.mulf %72, %72 : vector<8x32xf32>
      %cst_50 = arith.constant dense<0.000000e+00> : vector<8xf32>
      %74 = vector.multi_reduction <add>, %73, %cst_50 [1] : vector<8x32xf32> to vector<8xf32>
      %75 = vector.shape_cast %74 : vector<8xf32> to vector<8x1xf32>
      %cst_51 = arith.constant 3.200000e+01 : f32
      %76 = vector.broadcast %cst_51 : f32 to vector<8x1xf32>
      %77 = arith.divf %75, %76 : vector<8x1xf32>
      %78 = vector.broadcast %70 : vector<8x1xf32> to vector<8x32xf32>
      %79 = arith.subf %66, %78 : vector<8x32xf32>
      %cst_52 = arith.constant 9.99999996E-13 : f32
      %80 = vector.broadcast %cst_52 : f32 to vector<8x1xf32>
      %81 = arith.addf %77, %80 : vector<8x1xf32>
      %82 = math.rsqrt %81 : vector<8x1xf32>
      %83 = vector.broadcast %82 : vector<8x1xf32> to vector<8x32xf32>
      %84 = arith.mulf %79, %83 : vector<8x32xf32>
      %c0_53 = arith.constant 0 : index
      %c0_54 = arith.constant 0 : index
      %85 = vector.load %arg12[%c0_53, %c0_54] : memref<1x32xf32, #tpu.memory_space<vmem>>, vector<1x32xf32>
      %86 = vector.broadcast %85 : vector<1x32xf32> to vector<8x32xf32>
      %87 = arith.mulf %84, %86 : vector<8x32xf32>
      %c0_55 = arith.constant 0 : index
      %c0_56 = arith.constant 0 : index
      %88 = vector.load %arg13[%c0_55, %c0_56] : memref<1x32xf32, #tpu.memory_space<vmem>>, vector<1x32xf32>
      %89 = vector.broadcast %88 : vector<1x32xf32> to vector<8x32xf32>
      %90 = arith.addf %87, %89 : vector<8x32xf32>
      %91 = arith.truncf %90 : vector<8x32xf32> to vector<8x32xbf16>
      %c0_57 = arith.constant 0 : index
      %c0_58 = arith.constant 0 : index
      %92 = vector.load %arg14[%c0_57, %c0_58] : memref<32x64xbf16, #tpu.memory_space<vmem>>, vector<32x64xbf16>
      %cst_59 = arith.constant dense<0.000000e+00> : vector<8x64xf32>
      %93 = tpu.matmul %91, %92, %cst_59 {dimension_numbers = #tpu.dot_dimension_numbers<[1], [0], [0], [1], [0, 0, 1, 1], [], []>} : vector<8x32xbf16>, vector<32x64xbf16>, vector<8x64xf32> -> vector<8x64xf32>
      %c0_60 = arith.constant 0 : index
      %c0_61 = arith.constant 0 : index
      %94 = vector.load %arg15[%c0_60, %c0_61] : memref<1x64xf32, #tpu.memory_space<vmem>>, vector<1x64xf32>
      %95 = vector.broadcast %94 : vector<1x64xf32> to vector<8x64xf32>
      %96 = arith.addf %93, %95 : vector<8x64xf32>
      %cst_62 = arith.constant 5.000000e-01 : f32
      %97 = vector.broadcast %cst_62 : f32 to vector<8x64xf32>
      %98 = arith.mulf %97, %96 : vector<8x64xf32>
      %cst_63 = arith.constant 0.707106769 : f32
      %99 = vector.broadcast %cst_63 : f32 to vector<8x64xf32>
      %100 = arith.mulf %96, %99 : vector<8x64xf32>
      %101 = math.absf %100 : vector<8x64xf32>
      %cst_64 = arith.constant 0.327591091 : f32
      %102 = vector.broadcast %cst_64 : f32 to vector<8x64xf32>
      %103 = arith.mulf %102, %101 : vector<8x64xf32>
      %cst_65 = arith.constant 1.000000e+00 : f32
      %104 = vector.broadcast %cst_65 : f32 to vector<8x64xf32>
      %105 = arith.addf %104, %103 : vector<8x64xf32>
      %cst_66 = arith.constant 1.000000e+00 : f32
      %106 = vector.broadcast %cst_66 : f32 to vector<8x64xf32>
      %107 = arith.divf %106, %105 : vector<8x64xf32>
      %cst_67 = arith.constant 1.06140542 : f32
      %108 = vector.broadcast %cst_67 : f32 to vector<8x64xf32>
      %109 = arith.mulf %108, %107 : vector<8x64xf32>
      %cst_68 = arith.constant -1.45315206 : f32
      %110 = vector.broadcast %cst_68 : f32 to vector<8x64xf32>
      %111 = arith.addf %109, %110 : vector<8x64xf32>
      %112 = arith.mulf %111, %107 : vector<8x64xf32>
      %cst_69 = arith.constant 1.42141378 : f32
      %113 = vector.broadcast %cst_69 : f32 to vector<8x64xf32>
      %114 = arith.addf %112, %113 : vector<8x64xf32>
      %115 = arith.mulf %114, %107 : vector<8x64xf32>
      %cst_70 = arith.constant -0.284496725 : f32
      %116 = vector.broadcast %cst_70 : f32 to vector<8x64xf32>
      %117 = arith.addf %115, %116 : vector<8x64xf32>
      %118 = arith.mulf %117, %107 : vector<8x64xf32>
      %cst_71 = arith.constant 0.254829586 : f32
      %119 = vector.broadcast %cst_71 : f32 to vector<8x64xf32>
      %120 = arith.addf %118, %119 : vector<8x64xf32>
      %121 = arith.mulf %120, %107 : vector<8x64xf32>
      %cst_72 = arith.constant 0.000000e+00 : f32
      %122 = vector.broadcast %cst_72 : f32 to vector<8x64xf32>
      %123 = arith.subf %122, %101 : vector<8x64xf32>
      %124 = arith.mulf %123, %101 : vector<8x64xf32>
      %125 = math.exp %124 : vector<8x64xf32>
      %126 = arith.mulf %121, %125 : vector<8x64xf32>
      %cst_73 = arith.constant 1.000000e+00 : f32
      %127 = vector.broadcast %cst_73 : f32 to vector<8x64xf32>
      %128 = arith.subf %127, %126 : vector<8x64xf32>
      %cst_74 = arith.constant 0.000000e+00 : f32
      %129 = vector.broadcast %cst_74 : f32 to vector<8x64xf32>
      %130 = arith.cmpf oge, %100, %129 : vector<8x64xf32>
      %cst_75 = arith.constant 0.000000e+00 : f32
      %131 = vector.broadcast %cst_75 : f32 to vector<8x64xf32>
      %132 = arith.subf %131, %128 : vector<8x64xf32>
      %133 = arith.select %130, %128, %132 : vector<8x64xi1>, vector<8x64xf32>
      %cst_76 = arith.constant 1.000000e+00 : f32
      %134 = vector.broadcast %cst_76 : f32 to vector<8x64xf32>
      %135 = arith.addf %134, %133 : vector<8x64xf32>
      %136 = arith.mulf %98, %135 : vector<8x64xf32>
      %137 = arith.truncf %136 : vector<8x64xf32> to vector<8x64xbf16>
      %c0_77 = arith.constant 0 : index
      %c0_78 = arith.constant 0 : index
      %138 = vector.load %arg16[%c0_77, %c0_78] : memref<64x32xbf16, #tpu.memory_space<vmem>>, vector<64x32xbf16>
      %cst_79 = arith.constant dense<0.000000e+00> : vector<8x32xf32>
      %139 = tpu.matmul %137, %138, %cst_79 {dimension_numbers = #tpu.dot_dimension_numbers<[1], [0], [0], [1], [0, 0, 1, 1], [], []>} : vector<8x64xbf16>, vector<64x32xbf16>, vector<8x32xf32> -> vector<8x32xf32>
      %c0_80 = arith.constant 0 : index
      %c0_81 = arith.constant 0 : index
      %140 = vector.load %arg17[%c0_80, %c0_81] : memref<1x32xf32, #tpu.memory_space<vmem>>, vector<1x32xf32>
      %141 = vector.broadcast %140 : vector<1x32xf32> to vector<8x32xf32>
      %142 = arith.addf %139, %141 : vector<8x32xf32>
      %143 = arith.addf %142, %90 : vector<8x32xf32>
      %cst_82 = arith.constant dense<0.000000e+00> : vector<8xf32>
      %144 = vector.multi_reduction <add>, %143, %cst_82 [1] : vector<8x32xf32> to vector<8xf32>
      %145 = vector.shape_cast %144 : vector<8xf32> to vector<8x1xf32>
      %cst_83 = arith.constant 3.200000e+01 : f32
      %146 = vector.broadcast %cst_83 : f32 to vector<8x1xf32>
      %147 = arith.divf %145, %146 : vector<8x1xf32>
      %148 = vector.broadcast %147 : vector<8x1xf32> to vector<8x32xf32>
      %149 = arith.subf %143, %148 : vector<8x32xf32>
      %150 = arith.mulf %149, %149 : vector<8x32xf32>
      %cst_84 = arith.constant dense<0.000000e+00> : vector<8xf32>
      %151 = vector.multi_reduction <add>, %150, %cst_84 [1] : vector<8x32xf32> to vector<8xf32>
      %152 = vector.shape_cast %151 : vector<8xf32> to vector<8x1xf32>
      %cst_85 = arith.constant 3.200000e+01 : f32
      %153 = vector.broadcast %cst_85 : f32 to vector<8x1xf32>
      %154 = arith.divf %152, %153 : vector<8x1xf32>
      %155 = vector.broadcast %147 : vector<8x1xf32> to vector<8x32xf32>
      %156 = arith.subf %143, %155 : vector<8x32xf32>
      %cst_86 = arith.constant 9.99999996E-13 : f32
      %157 = vector.broadcast %cst_86 : f32 to vector<8x1xf32>
      %158 = arith.addf %154, %157 : vector<8x1xf32>
      %159 = math.rsqrt %158 : vector<8x1xf32>
      %160 = vector.broadcast %159 : vector<8x1xf32> to vector<8x32xf32>
      %161 = arith.mulf %156, %160 : vector<8x32xf32>
      %c0_87 = arith.constant 0 : index
      %c0_88 = arith.constant 0 : index
      %162 = vector.load %arg18[%c0_87, %c0_88] : memref<1x32xf32, #tpu.memory_space<vmem>>, vector<1x32xf32>
      %163 = vector.broadcast %162 : vector<1x32xf32> to vector<8x32xf32>
      %164 = arith.mulf %161, %163 : vector<8x32xf32>
      %c0_89 = arith.constant 0 : index
      %c0_90 = arith.constant 0 : index
      %165 = vector.load %arg19[%c0_89, %c0_90] : memref<1x32xf32, #tpu.memory_space<vmem>>, vector<1x32xf32>
      %166 = vector.broadcast %165 : vector<1x32xf32> to vector<8x32xf32>
      %167 = arith.addf %164, %166 : vector<8x32xf32>
      %c0_91 = arith.constant 0 : index
      %c0_92 = arith.constant 0 : index
      %c0_93 = arith.constant 0 : index
      %168 = vector.load %arg20[%c0_91, %c0_92, %c0_93] : memref<1x8x32xf32, #tpu.memory_space<vmem>>, vector<1x8x32xf32>
      %169 = vector.shape_cast %168 : vector<1x8x32xf32> to vector<8x32xf32>
      %170 = vector.shape_cast %167 : vector<8x32xf32> to vector<1x8x32xf32>
      tpu.vector_store %arg20[%c0_91, %c0_92, %c0_93], %170 {strides = array<i32>} : memref<1x8x32xf32, #tpu.memory_space<vmem>>, vector<1x8x32xf32>,
    } else {
    }
    return
  }
  func.func @transform_0(%arg0: i32, %arg1: i32) -> (i32, i32, i32) {
    %c0_i32 = arith.constant 0 : i32
    %c0_i32_0 = arith.constant 0 : i32
    %c0_i32_1 = arith.constant 0 : i32
    return %arg0, %c0_i32, %c0_i32_0 : i32, i32, i32
  }
  func.func @transform_1(%arg0: i32, %arg1: i32) -> (i32, i32, i32) {
    %c0_i32 = arith.constant 0 : i32
    %c0_i32_0 = arith.constant 0 : i32
    %c0_i32_1 = arith.constant 0 : i32
    return %arg0, %c0_i32, %c0_i32_0 : i32, i32, i32
  }
  func.func @transform_2(%arg0: i32, %arg1: i32) -> (i32, i32, i32) {
    %c0_i32 = arith.constant 0 : i32
    %c0_i32_0 = arith.constant 0 : i32
    %c0_i32_1 = arith.constant 0 : i32
    return %arg1, %c0_i32, %c0_i32_0 : i32, i32, i32
  }
  func.func @transform_3(%arg0: i32, %arg1: i32) -> (i32, i32, i32) {
    %c0_i32 = arith.constant 0 : i32
    %c0_i32_0 = arith.constant 0 : i32
    %c0_i32_1 = arith.constant 0 : i32
    return %arg1, %c0_i32, %c0_i32_0 : i32, i32, i32
  }
  func.func @transform_4(%arg0: i32, %arg1: i32) -> (i32, i32, i32) {
    %c0_i32 = arith.constant 0 : i32
    %c0_i32_0 = arith.constant 0 : i32
    %c0_i32_1 = arith.constant 0 : i32
    return %arg1, %c0_i32, %c0_i32_0 : i32, i32, i32
  }
  func.func @transform_5(%arg0: i32, %arg1: i32) -> (i32, i32, i32) {
    %c0_i32 = arith.constant 0 : i32
    %c0_i32_0 = arith.constant 0 : i32
    %c0_i32_1 = arith.constant 0 : i32
    return %arg1, %c0_i32, %c0_i32_0 : i32, i32, i32
  }
  func.func @transform_6(%arg0: i32, %arg1: i32) -> (i32, i32, i32) {
    %c0_i32 = arith.constant 0 : i32
    %c0_i32_0 = arith.constant 0 : i32
    %c0_i32_1 = arith.constant 0 : i32
    return %arg1, %c0_i32, %c0_i32_0 : i32, i32, i32
  }
  func.func @transform_7(%arg0: i32, %arg1: i32) -> (i32, i32, i32) {
    %c0_i32 = arith.constant 0 : i32
    %c0_i32_0 = arith.constant 0 : i32
    %c0_i32_1 = arith.constant 0 : i32
    return %arg1, %c0_i32, %c0_i32_0 : i32, i32, i32
  }
  func.func @transform_8(%arg0: i32, %arg1: i32) -> (i32, i32, i32) {
    %c0_i32 = arith.constant 0 : i32
    %c0_i32_0 = arith.constant 0 : i32
    %c0_i32_1 = arith.constant 0 : i32
    return %arg1, %c0_i32, %c0_i32_0 : i32, i32, i32
  }
  func.func @transform_9(%arg0: i32, %arg1: i32) -> (i32, i32) {
    %c0_i32 = arith.constant 0 : i32
    %c0_i32_0 = arith.constant 0 : i32
    %c0_i32_1 = arith.constant 0 : i32
    return %c0_i32, %c0_i32_0 : i32, i32
  }
  func.func @transform_10(%arg0: i32, %arg1: i32) -> (i32, i32) {
    %c0_i32 = arith.constant 0 : i32
    %c0_i32_0 = arith.constant 0 : i32
    %c0_i32_1 = arith.constant 0 : i32
    return %c0_i32, %c0_i32_0 : i32, i32
  }
  func.func @transform_11(%arg0: i32, %arg1: i32) -> (i32, i32) {
    %c0_i32 = arith.constant 0 : i32
    %c0_i32_0 = arith.constant 0 : i32
    %c0_i32_1 = arith.constant 0 : i32
    return %c0_i32, %c0_i32_0 : i32, i32
  }
  func.func @transform_12(%arg0: i32, %arg1: i32) -> (i32, i32) {
    %c0_i32 = arith.constant 0 : i32
    %c0_i32_0 = arith.constant 0 : i32
    %c0_i32_1 = arith.constant 0 : i32
    return %c0_i32, %c0_i32_0 : i32, i32
  }
  func.func @transform_13(%arg0: i32, %arg1: i32) -> (i32, i32) {
    %c0_i32 = arith.constant 0 : i32
    %c0_i32_0 = arith.constant 0 : i32
    %c0_i32_1 = arith.constant 0 : i32
    return %c0_i32, %c0_i32_0 : i32, i32
  }
  func.func @transform_14(%arg0: i32, %arg1: i32) -> (i32, i32) {
    %c0_i32 = arith.constant 0 : i32
    %c0_i32_0 = arith.constant 0 : i32
    %c0_i32_1 = arith.constant 0 : i32
    return %c0_i32, %c0_i32_0 : i32, i32
  }
  func.func @transform_15(%arg0: i32, %arg1: i32) -> (i32, i32) {
    %c0_i32 = arith.constant 0 : i32
    %c0_i32_0 = arith.constant 0 : i32
    %c0_i32_1 = arith.constant 0 : i32
    return %c0_i32, %c0_i32_0 : i32, i32
  }
  func.func @transform_16(%arg0: i32, %arg1: i32) -> (i32, i32) {
    %c0_i32 = arith.constant 0 : i32
    %c0_i32_0 = arith.constant 0 : i32
    %c0_i32_1 = arith.constant 0 : i32
    return %c0_i32, %c0_i32_0 : i32, i32
  }
  func.func @transform_17(%arg0: i32, %arg1: i32) -> (i32, i32) {
    %c0_i32 = arith.constant 0 : i32
    %c0_i32_0 = arith.constant 0 : i32
    %c0_i32_1 = arith.constant 0 : i32
    return %c0_i32, %c0_i32_0 : i32, i32
  }
  func.func @transform_18(%arg0: i32, %arg1: i32) -> (i32, i32, i32) {
    %c0_i32 = arith.constant 0 : i32
    %c0_i32_0 = arith.constant 0 : i32
    %c0_i32_1 = arith.constant 0 : i32
    return %arg0, %c0_i32, %c0_i32_0 : i32, i32, i32
  }
  func.func @transform_19(%arg0: i32, %arg1: i32) -> (i32, i32, i32, i32) {
    %c0_i32 = arith.constant 0 : i32
    %c0_i32_0 = arith.constant 0 : i32
    %c0_i32_1 = arith.constant 0 : i32
    return %arg0, %arg1, %c0_i32, %c0_i32_0 : i32, i32, i32, i32
  }
}

</mosaic_0001>

<llo_original>
// kernel: tpu_custom_call.1
$region0: #{tpu_custom_call.1}
  #allocation0 [shape = 'u32[]', space=smem, size = 0x4, offset = 0x4, fixed_abs, tag = 'smem constant byte address 0x4 - core index']
  #allocation1 [shape = 'u32[72,128]{1,0:T(1,128)}', space=vmem, size = 0x9000, scoped, tag = 'internal scratch']
  #allocation2 [shape = 'f32[8,32]{1,0:T(8,128)}', space=vmem, size = 0x1000, scoped, tag = 'scratch operand']
  %s0 = inlined_call_operand.vmem [shape: f32[2,8,32], index: 0, kind: input, shape index: {}]
  %s1 = inlined_call_operand.vmem [shape: f32[2,1,8], index: 1, kind: input, shape index: {}]
  %s2 = inlined_call_operand.vmem [shape: bf16[4,32,8], index: 2, kind: input, shape index: {}]
  %s3 = inlined_call_operand.vmem [shape: f32[4,1,8], index: 3, kind: input, shape index: {}]
  %s4 = inlined_call_operand.vmem [shape: bf16[4,32,8], index: 4, kind: input, shape index: {}]
  %s5 = inlined_call_operand.vmem [shape: f32[4,1,8], index: 5, kind: input, shape index: {}]
  %s6 = inlined_call_operand.vmem [shape: bf16[4,32,8], index: 6, kind: input, shape index: {}]
  %s7 = inlined_call_operand.vmem [shape: f32[4,1,8], index: 7, kind: input, shape index: {}]
  %s8 = inlined_call_operand.vmem [shape: bf16[4,8,32], index: 8, kind: input, shape index: {}]
  %s9 = inlined_call_operand.vmem [shape: f32[1,32], index: 9, kind: input, shape index: {}]
  %s10 = inlined_call_operand.vmem [shape: f32[1,32], index: 10, kind: input, shape index: {}]
  %s11 = inlined_call_operand.vmem [shape: f32[1,32], index: 11, kind: input, shape index: {}]
  %s12 = inlined_call_operand.vmem [shape: bf16[32,64], index: 12, kind: input, shape index: {}]
  %s13 = inlined_call_operand.vmem [shape: f32[1,64], index: 13, kind: input, shape index: {}]
  %s14 = inlined_call_operand.vmem [shape: bf16[64,32], index: 14, kind: input, shape index: {}]
  %s15 = inlined_call_operand.vmem [shape: f32[1,32], index: 15, kind: input, shape index: {}]
  %s16 = inlined_call_operand.vmem [shape: f32[1,32], index: 16, kind: input, shape index: {}]
  %s17 = inlined_call_operand.vmem [shape: f32[1,32], index: 17, kind: input, shape index: {}]
  %s18 = inlined_call_operand.hbm [shape: f32[2,8,32], index: 18, kind: output, shape index: {0}]
  %s19 = inlined_call_operand.hbm [shape: f32[2,4,8,8], index: 19, kind: output, shape index: {1}]
  %20 = xla_tuple %s18, %s19
  %s21 = sld [smem:[#allocation0]]
  $region121: #{tpu_custom_call.1} parent=0
    _
  %s23 = ssub.s32 1, %s21
  %s24 = scalar_select 0, %s23, %s21
  $region1: #{tpu_custom_call.1} parent=0
    #allocation3 [shape = 'u8[8192]{0}', space=vmem, size = 0x2000, scoped, tag = 'output window, operand 0']
    #allocation4 [shape = 's32[2]{0}', space=sflag, size = 0x8, scoped, tag = 'scoped memory for tpu_custom_call.1']
    #allocation5 [shape = 'u8[8192]{0}', space=vmem, size = 0x2000, scoped, tag = 'output window, operand 1']
    #allocation6 [shape = 's32[2]{0}', space=sflag, size = 0x8, scoped, tag = 'scoped memory for tpu_custom_call.1']
    %25 = vsyncpa [#allocation4], 0
    %s26 = scalar_lea.sflag [#allocation4], 1
    %27 = vsyncpa %s26, 0
    %28 = vsyncpa [#allocation6], 0
    %s29 = scalar_lea.sflag [#allocation6], 1
    %30 = vsyncpa %s29, 0
    loop: start=0, step=1, limit=10
    $region2: #{tpu_custom_call.1} parent=1 // loop_pre_header
      _
    $region3: #{tpu_custom_call.1} parent=1 // loop_header
      %s32 = sphi 0, %s36
      %p33 = scmp.ge.s32.totalorder %s32, 10
      %s39 = sphi 0, %s51
      %s40 = sphi 0, %s47
      %s41 = sphi 0, %s39
      %s42 = sphi 0, %s40
      %s43 = sphi 0, %s41
      %s44 = sphi 0, %s42
      %s54 = sphi 0, %s56
      %s57 = sphi 0, %s54
      %s58 = sphi 0, %s57
      %s74 = sphi 0, %s58
      %s80 = sphi 0, %s82
      %s83 = sphi 0, %s80
      %s84 = sphi 0, %s83
      %s100 = sphi 0, %s84
      %s106 = sphi 0, %s108
      %s109 = sphi 0, %s106
      %s110 = sphi 0, %s109
      %s126 = sphi 0, %s110
      %s132 = sphi 0, %s134
      %s135 = sphi 0, %s132
      %s136 = sphi 0, %s135
      %s152 = sphi 0, %s136
      %s158 = sphi 0, %s160
      %s161 = sphi 0, %s158
      %s162 = sphi 0, %s161
      %s178 = sphi 0, %s162
      %s184 = sphi 0, %s186
      %s187 = sphi 0, %s184
      %s188 = sphi 0, %s187
      %s204 = sphi 0, %s188
      %s210 = sphi 0, %s212
      %s213 = sphi 0, %s210
      %s214 = sphi 0, %s213
      %s230 = sphi 0, %s214
      %s236 = sphi 0, %s238
      %s239 = sphi 0, %s236
      %s240 = sphi 0, %s239
      %s256 = sphi 0, %s240
      %s262 = sphi 0, %s264
      %s265 = sphi 0, %s262
      %s266 = sphi 0, %s265
      %s282 = sphi 0, %s266
      %s286 = sphi 0, %s286
      %s288 = sphi 0, %s286
      %s289 = sphi 0, %s288
      %s303 = sphi 0, %s289
      %s307 = sphi 0, %s307
      %s309 = sphi 0, %s307
      %s310 = sphi 0, %s309
      %s324 = sphi 0, %s310
      %s328 = sphi 0, %s328
      %s330 = sphi 0, %s328
      %s331 = sphi 0, %s330
      %s345 = sphi 0, %s331
      %s349 = sphi 0, %s349
      %s351 = sphi 0, %s349
      %s352 = sphi 0, %s351
      %s366 = sphi 0, %s352
      %s370 = sphi 0, %s370
      %s372 = sphi 0, %s370
      %s373 = sphi 0, %s372
      %s387 = sphi 0, %s373
      %s391 = sphi 0, %s391
      %s393 = sphi 0, %s391
      %s394 = sphi 0, %s393
      %s408 = sphi 0, %s394
      %s412 = sphi 0, %s412
      %s414 = sphi 0, %s412
      %s415 = sphi 0, %s414
      %s429 = sphi 0, %s415
      %s433 = sphi 0, %s433
      %s435 = sphi 0, %s433
      %s436 = sphi 0, %s435
      %s450 = sphi 0, %s436
      %s454 = sphi 0, %s454
      %s456 = sphi 0, %s454
      %s457 = sphi 0, %s456
      %s471 = sphi 0, %s457
      %s477 = sphi 0, %s479
      %s480 = sphi 0, %s477
      %s481 = sphi 0, %s480
      %s497 = sphi 0, %s481
      %s505 = sphi 0, %s507
      %s508 = sphi 0, %s505
      %s509 = sphi 0, %s508
      %s525 = sphi 0, %s509
    $region4: #{tpu_custom_call.1} parent=1 // loop_header_branch
      %35 = sbr.rel (%p33) target = $region8
    $region5: #{tpu_custom_call.1} parent=1 // loop_body
      %s37 = ssub.s32 %s32, 1
      %s38 = ssub.s32 %s32, 2
      %s45 = sadd.s32 1, %s40
      %p46 = scmp.ge.s32.totalorder %s45, 4
      %s47 = scalar_select %p46, 0, %s45
      %s48 = sadd.s32 1, %s39
      %s49 = scalar_select %p46, %s48, %s39
      %p50 = scmp.ge.s32.totalorder %s49, 2
      %s51 = scalar_select %p50, 0, %s49
      %s52 = ssub.s32 %s39, %s51
      %p53 = scmp.eq.s32.totalorder %s52, 0
      %s55 = sadd.s32 %s54, 1
      %s56 = scalar_select %p53, %s54, %s55
      %p59 = pneg %p53
      %p60 = scmp.eq.s32.totalorder %s32, 7
      %p61 = por %p59, %p60
      %p62 = scmp.ne.s32.totalorder %s54, %s57
      %p63 = scmp.eq.s32.totalorder %s32, 0
      %p64 = por %p62, %p63
      %p65 = scmp.ne.s32.totalorder %s54, %s57
      %p66 = scmp.eq.s32.totalorder %s37, 7
      %p67 = por %p65, %p66
      %p68 = scmp.ne.s32.totalorder %s57, %s58
      %p69 = scmp.eq.s32.totalorder %s37, 0
      %p70 = por %p68, %p69
      %p71 = scmp.ne.s32.totalorder %s57, %s58
      %p72 = scmp.eq.s32.totalorder %s38, 7
      %p73 = por %p71, %p72
      %p75 = scmp.ne.s32.totalorder %s58, %s74
      %p76 = scmp.eq.s32.totalorder %s38, 0
      %p77 = por %p75, %p76
      %s78 = ssub.s32 %s39, %s51
      %p79 = scmp.eq.s32.totalorder %s78, 0
      %s81 = sadd.s32 %s80, 1
      %s82 = scalar_select %p79, %s80, %s81
      %p85 = pneg %p79
      %p86 = scmp.eq.s32.totalorder %s32, 7
      %p87 = por %p85, %p86
      %p88 = scmp.ne.s32.totalorder %s80, %s83
      %p89 = scmp.eq.s32.totalorder %s32, 0
      %p90 = por %p88, %p89
      %p91 = scmp.ne.s32.totalorder %s80, %s83
      %p92 = scmp.eq.s32.totalorder %s37, 7
      %p93 = por %p91, %p92
      %p94 = scmp.ne.s32.totalorder %s83, %s84
      %p95 = scmp.eq.s32.totalorder %s37, 0
      %p96 = por %p94, %p95
      %p97 = scmp.ne.s32.totalorder %s83, %s84
      %p98 = scmp.eq.s32.totalorder %s38, 7
      %p99 = por %p97, %p98
      %p101 = scmp.ne.s32.totalorder %s84, %s100
      %p102 = scmp.eq.s32.totalorder %s38, 0
      %p103 = por %p101, %p102
      %s104 = ssub.s32 %s40, %s47
      %p105 = scmp.eq.s32.totalorder %s104, 0
      %s107 = sadd.s32 %s106, 1
      %s108 = scalar_select %p105, %s106, %s107
      %p111 = pneg %p105
      %p112 = scmp.eq.s32.totalorder %s32, 7
      %p113 = por %p111, %p112
      %p114 = scmp.ne.s32.totalorder %s106, %s109
      %p115 = scmp.eq.s32.totalorder %s32, 0
      %p116 = por %p114, %p115
      %p117 = scmp.ne.s32.totalorder %s106, %s109
      %p118 = scmp.eq.s32.totalorder %s37, 7
      %p119 = por %p117, %p118
      %p120 = scmp.ne.s32.totalorder %s109, %s110
      %p121 = scmp.eq.s32.totalorder %s37, 0
      %p122 = por %p120, %p121
      %p123 = scmp.ne.s32.totalorder %s109, %s110
      %p124 = scmp.eq.s32.totalorder %s38, 7
      %p125 = por %p123, %p124
      %p127 = scmp.ne.s32.totalorder %s110, %s126
      %p128 = scmp.eq.s32.totalorder %s38, 0
      %p129 = por %p127, %p128
      %s130 = ssub.s32 %s40, %s47
      %p131 = scmp.eq.s32.totalorder %s130, 0
      %s133 = sadd.s32 %s132, 1
      %s134 = scalar_select %p131, %s132, %s133
      %p137 = pneg %p131
      %p138 = scmp.eq.s32.totalorder %s32, 7
      %p139 = por %p137, %p138
      %p140 = scmp.ne.s32.totalorder %s132, %s135
      %p141 = scmp.eq.s32.totalorder %s32, 0
      %p142 = por %p140, %p141
      %p143 = scmp.ne.s32.totalorder %s132, %s135
      %p144 = scmp.eq.s32.totalorder %s37, 7
      %p145 = por %p143, %p144
      %p146 = scmp.ne.s32.totalorder %s135, %s136
      %p147 = scmp.eq.s32.totalorder %s37, 0
      %p148 = por %p146, %p147
      %p149 = scmp.ne.s32.totalorder %s135, %s136
      %p150 = scmp.eq.s32.totalorder %s38, 7
      %p151 = por %p149, %p150
      %p153 = scmp.ne.s32.totalorder %s136, %s152
      %p154 = scmp.eq.s32.totalorder %s38, 0
      %p155 = por %p153, %p154
      %s156 = ssub.s32 %s40, %s47
      %p157 = scmp.eq.s32.totalorder %s156, 0
      %s159 = sadd.s32 %s158, 1
      %s160 = scalar_select %p157, %s158, %s159
      %p163 = pneg %p157
      %p164 = scmp.eq.s32.totalorder %s32, 7
      %p165 = por %p163, %p164
      %p166 = scmp.ne.s32.totalorder %s158, %s161
      %p167 = scmp.eq.s32.totalorder %s32, 0
      %p168 = por %p166, %p167
      %p169 = scmp.ne.s32.totalorder %s158, %s161
      %p170 = scmp.eq.s32.totalorder %s37, 7
      %p171 = por %p169, %p170
      %p172 = scmp.ne.s32.totalorder %s161, %s162
      %p173 = scmp.eq.s32.totalorder %s37, 0
      %p174 = por %p172, %p173
      %p175 = scmp.ne.s32.totalorder %s161, %s162
      %p176 = scmp.eq.s32.totalorder %s38, 7
      %p177 = por %p175, %p176
      %p179 = scmp.ne.s32.totalorder %s162, %s178
      %p180 = scmp.eq.s32.totalorder %s38, 0
      %p181 = por %p179, %p180
      %s182 = ssub.s32 %s40, %s47
      %p183 = scmp.eq.s32.totalorder %s182, 0
      %s185 = sadd.s32 %s184, 1
      %s186 = scalar_select %p183, %s184, %s185
      %p189 = pneg %p183
      %p190 = scmp.eq.s32.totalorder %s32, 7
      %p191 = por %p189, %p190
      %p192 = scmp.ne.s32.totalorder %s184, %s187
      %p193 = scmp.eq.s32.totalorder %s32, 0
      %p194 = por %p192, %p193
      %p195 = scmp.ne.s32.totalorder %s184, %s187
      %p196 = scmp.eq.s32.totalorder %s37, 7
      %p197 = por %p195, %p196
      %p198 = scmp.ne.s32.totalorder %s187, %s188
      %p199 = scmp.eq.s32.totalorder %s37, 0
      %p200 = por %p198, %p199
      %p201 = scmp.ne.s32.totalorder %s187, %s188
      %p202 = scmp.eq.s32.totalorder %s38, 7
      %p203 = por %p201, %p202
      %p205 = scmp.ne.s32.totalorder %s188, %s204
      %p206 = scmp.eq.s32.totalorder %s38, 0
      %p207 = por %p205, %p206
      %s208 = ssub.s32 %s40, %s47
      %p209 = scmp.eq.s32.totalorder %s208, 0
      %s211 = sadd.s32 %s210, 1
      %s212 = scalar_select %p209, %s210, %s211
      %p215 = pneg %p209
      %p216 = scmp.eq.s32.totalorder %s32, 7
      %p217 = por %p215, %p216
      %p218 = scmp.ne.s32.totalorder %s210, %s213
      %p219 = scmp.eq.s32.totalorder %s32, 0
      %p220 = por %p218, %p219
      %p221 = scmp.ne.s32.totalorder %s210, %s213
      %p222 = scmp.eq.s32.totalorder %s37, 7
      %p223 = por %p221, %p222
      %p224 = scmp.ne.s32.totalorder %s213, %s214
      %p225 = scmp.eq.s32.totalorder %s37, 0
      %p226 = por %p224, %p225
      %p227 = scmp.ne.s32.totalorder %s213, %s214
      %p228 = scmp.eq.s32.totalorder %s38, 7
      %p229 = por %p227, %p228
      %p231 = scmp.ne.s32.totalorder %s214, %s230
      %p232 = scmp.eq.s32.totalorder %s38, 0
      %p233 = por %p231, %p232
      %s234 = ssub.s32 %s40, %s47
      %p235 = scmp.eq.s32.totalorder %s234, 0
      %s237 = sadd.s32 %s236, 1
      %s238 = scalar_select %p235, %s236, %s237
      %p241 = pneg %p235
      %p242 = scmp.eq.s32.totalorder %s32, 7
      %p243 = por %p241, %p242
      %p244 = scmp.ne.s32.totalorder %s236, %s239
      %p245 = scmp.eq.s32.totalorder %s32, 0
      %p246 = por %p244, %p245
      %p247 = scmp.ne.s32.totalorder %s236, %s239
      %p248 = scmp.eq.s32.totalorder %s37, 7
      %p249 = por %p247, %p248
      %p250 = scmp.ne.s32.totalorder %s239, %s240
      %p251 = scmp.eq.s32.totalorder %s37, 0
      %p252 = por %p250, %p251
      %p253 = scmp.ne.s32.totalorder %s239, %s240
      %p254 = scmp.eq.s32.totalorder %s38, 7
      %p255 = por %p253, %p254
      %p257 = scmp.ne.s32.totalorder %s240, %s256
      %p258 = scmp.eq.s32.totalorder %s38, 0
      %p259 = por %p257, %p258
      %s260 = ssub.s32 %s40, %s47
      %p261 = scmp.eq.s32.totalorder %s260, 0
      %s263 = sadd.s32 %s262, 1
      %s264 = scalar_select %p261, %s262, %s263
      %p267 = pneg %p261
      %p268 = scmp.eq.s32.totalorder %s32, 7
      %p269 = por %p267, %p268
      %p270 = scmp.ne.s32.totalorder %s262, %s265
      %p271 = scmp.eq.s32.totalorder %s32, 0
      %p272 = por %p270, %p271
      %p273 = scmp.ne.s32.totalorder %s262, %s265
      %p274 = scmp.eq.s32.totalorder %s37, 7
      %p275 = por %p273, %p274
      %p276 = scmp.ne.s32.totalorder %s265, %s266
      %p277 = scmp.eq.s32.totalorder %s37, 0
      %p278 = por %p276, %p277
      %p279 = scmp.ne.s32.totalorder %s265, %s266
      %p280 = scmp.eq.s32.totalorder %s38, 7
      %p281 = por %p279, %p280
      %p283 = scmp.ne.s32.totalorder %s266, %s282
      %p284 = scmp.eq.s32.totalorder %s38, 0
      %p285 = por %p283, %p284
      %s287 = sadd.s32 %s286, 1
      %p290 = scmp.eq.s32.totalorder %s32, 7
      %p291 = scmp.ne.s32.totalorder %s286, %s288
      %p292 = scmp.eq.s32.totalorder %s32, 0
      %p293 = por %p291, %p292
      %p294 = scmp.ne.s32.totalorder %s286, %s288
      %p295 = scmp.eq.s32.totalorder %s37, 7
      %p296 = por %p294, %p295
      %p297 = scmp.ne.s32.totalorder %s288, %s289
      %p298 = scmp.eq.s32.totalorder %s37, 0
      %p299 = por %p297, %p298
      %p300 = scmp.ne.s32.totalorder %s288, %s289
      %p301 = scmp.eq.s32.totalorder %s38, 7
      %p302 = por %p300, %p301
      %p304 = scmp.ne.s32.totalorder %s289, %s303
      %p305 = scmp.eq.s32.totalorder %s38, 0
      %p306 = por %p304, %p305
      %s308 = sadd.s32 %s307, 1
      %p311 = scmp.eq.s32.totalorder %s32, 7
      %p312 = scmp.ne.s32.totalorder %s307, %s309
      %p313 = scmp.eq.s32.totalorder %s32, 0
      %p314 = por %p312, %p313
      %p315 = scmp.ne.s32.totalorder %s307, %s309
      %p316 = scmp.eq.s32.totalorder %s37, 7
      %p317 = por %p315, %p316
      %p318 = scmp.ne.s32.totalorder %s309, %s310
      %p319 = scmp.eq.s32.totalorder %s37, 0
      %p320 = por %p318, %p319
      %p321 = scmp.ne.s32.totalorder %s309, %s310
      %p322 = scmp.eq.s32.totalorder %s38, 7
      %p323 = por %p321, %p322
      %p325 = scmp.ne.s32.totalorder %s310, %s324
      %p326 = scmp.eq.s32.totalorder %s38, 0
      %p327 = por %p325, %p326
      %s329 = sadd.s32 %s328, 1
      %p332 = scmp.eq.s32.totalorder %s32, 7
      %p333 = scmp.ne.s32.totalorder %s328, %s330
      %p334 = scmp.eq.s32.totalorder %s32, 0
      %p335 = por %p333, %p334
      %p336 = scmp.ne.s32.totalorder %s328, %s330
      %p337 = scmp.eq.s32.totalorder %s37, 7
      %p338 = por %p336, %p337
      %p339 = scmp.ne.s32.totalorder %s330, %s331
      %p340 = scmp.eq.s32.totalorder %s37, 0
      %p341 = por %p339, %p340
      %p342 = scmp.ne.s32.totalorder %s330, %s331
      %p343 = scmp.eq.s32.totalorder %s38, 7
      %p344 = por %p342, %p343
      %p346 = scmp.ne.s32.totalorder %s331, %s345
      %p347 = scmp.eq.s32.totalorder %s38, 0
      %p348 = por %p346, %p347
      %s350 = sadd.s32 %s349, 1
      %p353 = scmp.eq.s32.totalorder %s32, 7
      %p354 = scmp.ne.s32.totalorder %s349, %s351
      %p355 = scmp.eq.s32.totalorder %s32, 0
      %p356 = por %p354, %p355
      %p357 = scmp.ne.s32.totalorder %s349, %s351
      %p358 = scmp.eq.s32.totalorder %s37, 7
      %p359 = por %p357, %p358
      %p360 = scmp.ne.s32.totalorder %s351, %s352
      %p361 = scmp.eq.s32.totalorder %s37, 0
      %p362 = por %p360, %p361
      %p363 = scmp.ne.s32.totalorder %s351, %s352
      %p364 = scmp.eq.s32.totalorder %s38, 7
      %p365 = por %p363, %p364
      %p367 = scmp.ne.s32.totalorder %s352, %s366
      %p368 = scmp.eq.s32.totalorder %s38, 0
      %p369 = por %p367, %p368
      %s371 = sadd.s32 %s370, 1
      %p374 = scmp.eq.s32.totalorder %s32, 7
      %p375 = scmp.ne.s32.totalorder %s370, %s372
      %p376 = scmp.eq.s32.totalorder %s32, 0
      %p377 = por %p375, %p376
      %p378 = scmp.ne.s32.totalorder %s370, %s372
      %p379 = scmp.eq.s32.totalorder %s37, 7
      %p380 = por %p378, %p379
      %p381 = scmp.ne.s32.totalorder %s372, %s373
      %p382 = scmp.eq.s32.totalorder %s37, 0
      %p383 = por %p381, %p382
      %p384 = scmp.ne.s32.totalorder %s372, %s373
      %p385 = scmp.eq.s32.totalorder %s38, 7
      %p386 = por %p384, %p385
      %p388 = scmp.ne.s32.totalorder %s373, %s387
      %p389 = scmp.eq.s32.totalorder %s38, 0
      %p390 = por %p388, %p389
      %s392 = sadd.s32 %s391, 1
      %p395 = scmp.eq.s32.totalorder %s32, 7
      %p396 = scmp.ne.s32.totalorder %s391, %s393
      %p397 = scmp.eq.s32.totalorder %s32, 0
      %p398 = por %p396, %p397
      %p399 = scmp.ne.s32.totalorder %s391, %s393
      %p400 = scmp.eq.s32.totalorder %s37, 7
      %p401 = por %p399, %p400
      %p402 = scmp.ne.s32.totalorder %s393, %s394
      %p403 = scmp.eq.s32.totalorder %s37, 0
      %p404 = por %p402, %p403
      %p405 = scmp.ne.s32.totalorder %s393, %s394
      %p406 = scmp.eq.s32.totalorder %s38, 7
      %p407 = por %p405, %p406
      %p409 = scmp.ne.s32.totalorder %s394, %s408
      %p410 = scmp.eq.s32.totalorder %s38, 0
      %p411 = por %p409, %p410
      %s413 = sadd.s32 %s412, 1
      %p416 = scmp.eq.s32.totalorder %s32, 7
      %p417 = scmp.ne.s32.totalorder %s412, %s414
      %p418 = scmp.eq.s32.totalorder %s32, 0
      %p419 = por %p417, %p418
      %p420 = scmp.ne.s32.totalorder %s412, %s414
      %p421 = scmp.eq.s32.totalorder %s37, 7
      %p422 = por %p420, %p421
      %p423 = scmp.ne.s32.totalorder %s414, %s415
      %p424 = scmp.eq.s32.totalorder %s37, 0
      %p425 = por %p423, %p424
      %p426 = scmp.ne.s32.totalorder %s414, %s415
      %p427 = scmp.eq.s32.totalorder %s38, 7
      %p428 = por %p426, %p427
      %p430 = scmp.ne.s32.totalorder %s415, %s429
      %p431 = scmp.eq.s32.totalorder %s38, 0
      %p432 = por %p430, %p431
      %s434 = sadd.s32 %s433, 1
      %p437 = scmp.eq.s32.totalorder %s32, 7
      %p438 = scmp.ne.s32.totalorder %s433, %s435
      %p439 = scmp.eq.s32.totalorder %s32, 0
      %p440 = por %p438, %p439
      %p441 = scmp.ne.s32.totalorder %s433, %s435
      %p442 = scmp.eq.s32.totalorder %s37, 7
      %p443 = por %p441, %p442
      %p444 = scmp.ne.s32.totalorder %s435, %s436
      %p445 = scmp.eq.s32.totalorder %s37, 0
      %p446 = por %p444, %p445
      %p447 = scmp.ne.s32.totalorder %s435, %s436
      %p448 = scmp.eq.s32.totalorder %s38, 7
      %p449 = por %p447, %p448
      %p451 = scmp.ne.s32.totalorder %s436, %s450
      %p452 = scmp.eq.s32.totalorder %s38, 0
      %p453 = por %p451, %p452
      %s455 = sadd.s32 %s454, 1
      %p458 = scmp.eq.s32.totalorder %s32, 7
      %p459 = scmp.ne.s32.totalorder %s454, %s456
      %p460 = scmp.eq.s32.totalorder %s32, 0
      %p461 = por %p459, %p460
      %p462 = scmp.ne.s32.totalorder %s454, %s456
      %p463 = scmp.eq.s32.totalorder %s37, 7
      %p464 = por %p462, %p463
      %p465 = scmp.ne.s32.totalorder %s456, %s457
      %p466 = scmp.eq.s32.totalorder %s37, 0
      %p467 = por %p465, %p466
      %p468 = scmp.ne.s32.totalorder %s456, %s457
      %p469 = scmp.eq.s32.totalorder %s38, 7
      %p470 = por %p468, %p469
      %p472 = scmp.ne.s32.totalorder %s457, %s471
      %p473 = scmp.eq.s32.totalorder %s38, 0
      %p474 = por %p472, %p473
      %s475 = ssub.s32 %s39, %s51
      %p476 = scmp.eq.s32.totalorder %s475, 0
      %s478 = sadd.s32 %s477, 1
      %s479 = scalar_select %p476, %s477, %s478
      %p482 = pneg %p476
      %p483 = scmp.eq.s32.totalorder %s32, 7
      %p484 = por %p482, %p483
      %p485 = scmp.ne.s32.totalorder %s477, %s480
      %p486 = scmp.eq.s32.totalorder %s32, 0
      %p487 = por %p485, %p486
      %p488 = scmp.ne.s32.totalorder %s477, %s480
      %p489 = scmp.eq.s32.totalorder %s37, 7
      %p490 = por %p488, %p489
      %p491 = scmp.ne.s32.totalorder %s480, %s481
      %p492 = scmp.eq.s32.totalorder %s37, 0
      %p493 = por %p491, %p492
      %p494 = scmp.ne.s32.totalorder %s480, %s481
      %p495 = scmp.eq.s32.totalorder %s38, 7
      %p496 = por %p494, %p495
      %p498 = scmp.ne.s32.totalorder %s481, %s497
      %p499 = scmp.eq.s32.totalorder %s38, 0
      %p500 = por %p498, %p499
      %s501 = ssub.s32 %s39, %s51
      %s502 = ssub.s32 %s40, %s47
      %s503 = sor.u32 %s501, %s502
      %p504 = scmp.eq.s32.totalorder %s503, 0
      %s506 = sadd.s32 %s505, 1
      %s507 = scalar_select %p504, %s505, %s506
      %p510 = pneg %p504
      %p511 = scmp.eq.s32.totalorder %s32, 7
      %p512 = por %p510, %p511
      %p513 = scmp.ne.s32.totalorder %s505, %s508
      %p514 = scmp.eq.s32.totalorder %s32, 0
      %p515 = por %p513, %p514
      %p516 = scmp.ne.s32.totalorder %s505, %s508
      %p517 = scmp.eq.s32.totalorder %s37, 7
      %p518 = por %p516, %p517
      %p519 = scmp.ne.s32.totalorder %s508, %s509
      %p520 = scmp.eq.s32.totalorder %s37, 0
      %p521 = por %p519, %p520
      %p522 = scmp.ne.s32.totalorder %s508, %s509
      %p523 = scmp.eq.s32.totalorder %s38, 7
      %p524 = por %p522, %p523
      %p526 = scmp.ne.s32.totalorder %s509, %s525
      %p527 = scmp.eq.s32.totalorder %s38, 0
      %p528 = por %p526, %p527
      %p529 = scmp.le.s32.totalorder 1, %s32
      %p530 = scmp.lt.s32.totalorder %s32, 9
      %p531 = pnand %p529, %p530
      %p532 = pneg %p531
      // Predicated region
      $region9: #{tpu_custom_call.1} parent=5 // pred_check
        _
      $region10: #{tpu_custom_call.1} parent=5 // pred_check_branch
        %534 = sbr.rel (%p531) target = $region12
      $region11: #{tpu_custom_call.1} parent=5 // pred_region
        %s535 = ssub.s32 %s32, 1
        // Predicated region
        $region13: #{tpu_custom_call.1} parent=11 // pred_check
          %p536 = pneg %p299
        $region14: #{tpu_custom_call.1} parent=11 // pred_check_branch
          %538 = sbr.rel (%p536) target = $region16
        $region15: #{tpu_custom_call.1} parent=11 // pred_region
          _
        $region16: #{tpu_custom_call.1} parent=11 // pred_fallthru
          _
        // Predicated region
        $region17: #{tpu_custom_call.1} parent=11 // pred_check
          %p539 = pneg %p320
        $region18: #{tpu_custom_call.1} parent=11 // pred_check_branch
          %541 = sbr.rel (%p539) target = $region20
        $region19: #{tpu_custom_call.1} parent=11 // pred_region
          _
        $region20: #{tpu_custom_call.1} parent=11 // pred_fallthru
          _
        // Predicated region
        $region21: #{tpu_custom_call.1} parent=11 // pred_check
          %p542 = pneg %p341
        $region22: #{tpu_custom_call.1} parent=11 // pred_check_branch
          %544 = sbr.rel (%p542) target = $region24
        $region23: #{tpu_custom_call.1} parent=11 // pred_region
          _
        $region24: #{tpu_custom_call.1} parent=11 // pred_fallthru
          _
        // Predicated region
        $region25: #{tpu_custom_call.1} parent=11 // pred_check
          %p545 = pneg %p362
        $region26: #{tpu_custom_call.1} parent=11 // pred_check_branch
          %547 = sbr.rel (%p545) target = $region28
        $region27: #{tpu_custom_call.1} parent=11 // pred_region
          _
        $region28: #{tpu_custom_call.1} parent=11 // pred_fallthru
          _
        // Predicated region
        $region29: #{tpu_custom_call.1} parent=11 // pred_check
          %p548 = pneg %p383
        $region30: #{tpu_custom_call.1} parent=11 // pred_check_branch
          %550 = sbr.rel (%p548) target = $region32
        $region31: #{tpu_custom_call.1} parent=11 // pred_region
          _
        $region32: #{tpu_custom_call.1} parent=11 // pred_fallthru
          _
        // Predicated region
        $region33: #{tpu_custom_call.1} parent=11 // pred_check
          %p551 = pneg %p404
        $region34: #{tpu_custom_call.1} parent=11 // pred_check_branch
          %553 = sbr.rel (%p551) target = $region36
        $region35: #{tpu_custom_call.1} parent=11 // pred_region
          _
        $region36: #{tpu_custom_call.1} parent=11 // pred_fallthru
          _
        // Predicated region
        $region37: #{tpu_custom_call.1} parent=11 // pred_check
          %p554 = pneg %p425
        $region38: #{tpu_custom_call.1} parent=11 // pred_check_branch
          %556 = sbr.rel (%p554) target = $region40
        $region39: #{tpu_custom_call.1} parent=11 // pred_region
          _
        $region40: #{tpu_custom_call.1} parent=11 // pred_fallthru
          _
        // Predicated region
        $region41: #{tpu_custom_call.1} parent=11 // pred_check
          %p557 = pneg %p446
        $region42: #{tpu_custom_call.1} parent=11 // pred_check_branch
          %559 = sbr.rel (%p557) target = $region44
        $region43: #{tpu_custom_call.1} parent=11 // pred_region
          _
        $region44: #{tpu_custom_call.1} parent=11 // pred_fallthru
          _
        // Predicated region
        $region45: #{tpu_custom_call.1} parent=11 // pred_check
          %p560 = pneg %p467
        $region46: #{tpu_custom_call.1} parent=11 // pred_check_branch
          %562 = sbr.rel (%p560) target = $region48
        $region47: #{tpu_custom_call.1} parent=11 // pred_region
          _
        $region48: #{tpu_custom_call.1} parent=11 // pred_fallthru
          _
      $region12: #{tpu_custom_call.1} parent=5 // pred_fallthru
        _
      %p563 = scmp.lt.s32.totalorder %s32, 8
      // Predicated region
      $region49: #{tpu_custom_call.1} parent=5 // pred_check
        %p564 = pneg %p563
      $region50: #{tpu_custom_call.1} parent=5 // pred_check_branch
        %566 = sbr.rel (%p564) target = $region52
      $region51: #{tpu_custom_call.1} parent=5 // pred_region
        // Predicated region
        $region53: #{tpu_custom_call.1} parent=51 // pred_check
          %p567 = pneg %p64
        $region54: #{tpu_custom_call.1} parent=51 // pred_check_branch
          %569 = sbr.rel (%p567) target = $region56
        $region55: #{tpu_custom_call.1} parent=51 // pred_region
          %p570 = scmp.lt.s32.totalorder %s39, 1
          %s571 = scalar_select %p570, %s39, 1
          %s572 = smul.addr %s571, 8
          %s573 = scalar_lea.vmem %s0, %s572
        $region56: #{tpu_custom_call.1} parent=51 // pred_fallthru
          _
        // Predicated region
        $region57: #{tpu_custom_call.1} parent=51 // pred_check
          %p574 = pneg %p90
        $region58: #{tpu_custom_call.1} parent=51 // pred_check_branch
          %576 = sbr.rel (%p574) target = $region60
        $region59: #{tpu_custom_call.1} parent=51 // pred_region
          %p577 = scmp.lt.s32.totalorder %s39, 1
          %s578 = scalar_select %p577, %s39, 1
          %s579 = scalar_lea.vmem %s1, %s578
        $region60: #{tpu_custom_call.1} parent=51 // pred_fallthru
          _
        // Predicated region
        $region61: #{tpu_custom_call.1} parent=51 // pred_check
          %p580 = pneg %p116
        $region62: #{tpu_custom_call.1} parent=51 // pred_check_branch
          %582 = sbr.rel (%p580) target = $region64
        $region63: #{tpu_custom_call.1} parent=51 // pred_region
          %p583 = scmp.lt.s32.totalorder %s40, 3
          %s584 = scalar_select %p583, %s40, 3
          %s585 = smul.addr %s584, 4
          %s586 = smul.addr %s585, 4
          %s587 = scalar_lea.vmem %s2, %s586
        $region64: #{tpu_custom_call.1} parent=51 // pred_fallthru
          _
        // Predicated region
        $region65: #{tpu_custom_call.1} parent=51 // pred_check
          %p588 = pneg %p142
        $region66: #{tpu_custom_call.1} parent=51 // pred_check_branch
          %590 = sbr.rel (%p588) target = $region68
        $region67: #{tpu_custom_call.1} parent=51 // pred_region
          %p591 = scmp.lt.s32.totalorder %s40, 3
          %s592 = scalar_select %p591, %s40, 3
          %s593 = scalar_lea.vmem %s3, %s592
        $region68: #{tpu_custom_call.1} parent=51 // pred_fallthru
          _
        // Predicated region
        $region69: #{tpu_custom_call.1} parent=51 // pred_check
          %p594 = pneg %p168
        $region70: #{tpu_custom_call.1} parent=51 // pred_check_branch
          %596 = sbr.rel (%p594) target = $region72
        $region71: #{tpu_custom_call.1} parent=51 // pred_region
          %p597 = scmp.lt.s32.totalorder %s40, 3
          %s598 = scalar_select %p597, %s40, 3
          %s599 = smul.addr %s598, 4
          %s600 = smul.addr %s599, 4
          %s601 = scalar_lea.vmem %s4, %s600
        $region72: #{tpu_custom_call.1} parent=51 // pred_fallthru
          _
        // Predicated region
        $region73: #{tpu_custom_call.1} parent=51 // pred_check
          %p602 = pneg %p194
        $region74: #{tpu_custom_call.1} parent=51 // pred_check_branch
          %604 = sbr.rel (%p602) target = $region76
        $region75: #{tpu_custom_call.1} parent=51 // pred_region
          %p605 = scmp.lt.s32.totalorder %s40, 3
          %s606 = scalar_select %p605, %s40, 3
          %s607 = scalar_lea.vmem %s5, %s606
        $region76: #{tpu_custom_call.1} parent=51 // pred_fallthru
          _
        // Predicated region
        $region77: #{tpu_custom_call.1} parent=51 // pred_check
          %p608 = pneg %p220
        $region78: #{tpu_custom_call.1} parent=51 // pred_check_branch
          %610 = sbr.rel (%p608) target = $region80
        $region79: #{tpu_custom_call.1} parent=51 // pred_region
          %p611 = scmp.lt.s32.totalorder %s40, 3
          %s612 = scalar_select %p611, %s40, 3
          %s613 = smul.addr %s612, 4
          %s614 = smul.addr %s613, 4
          %s615 = scalar_lea.vmem %s6, %s614
        $region80: #{tpu_custom_call.1} parent=51 // pred_fallthru
          _
        // Predicated region
        $region81: #{tpu_custom_call.1} parent=51 // pred_check
          %p616 = pneg %p246
        $region82: #{tpu_custom_call.1} parent=51 // pred_check_branch
          %618 = sbr.rel (%p616) target = $region84
        $region83: #{tpu_custom_call.1} parent=51 // pred_region
          %p619 = scmp.lt.s32.totalorder %s40, 3
          %s620 = scalar_select %p619, %s40, 3
          %s621 = scalar_lea.vmem %s7, %s620
        $region84: #{tpu_custom_call.1} parent=51 // pred_fallthru
          _
        // Predicated region
        $region85: #{tpu_custom_call.1} parent=51 // pred_check
          %p622 = pneg %p272
        $region86: #{tpu_custom_call.1} parent=51 // pred_check_branch
          %624 = sbr.rel (%p622) target = $region88
        $region87: #{tpu_custom_call.1} parent=51 // pred_region
          %p625 = scmp.lt.s32.totalorder %s40, 3
          %s626 = scalar_select %p625, %s40, 3
          %s627 = smul.addr %s626, 4
          %s628 = scalar_lea.vmem %s8, %s627
        $region88: #{tpu_custom_call.1} parent=51 // pred_fallthru
          _
      $region52: #{tpu_custom_call.1} parent=5 // pred_fallthru
        _
      %p629 = scmp.le.s32.totalorder 1, %s32
      %p630 = scmp.lt.s32.totalorder %s32, 9
      %p631 = pnand %p629, %p630
      %p632 = pneg %p631
      // Predicated region
      $region89: #{tpu_custom_call.1} parent=5 // pred_check
        _
      $region90: #{tpu_custom_call.1} parent=5 // pred_check_branch
        %634 = sbr.rel (%p631) target = $region92
      $region91: #{tpu_custom_call.1} parent=5 // pred_region
        %s635 = ssub.s32 %s32, 1
        %p636 = scmp.lt.s32.totalorder %s41, 1
        %s637 = scalar_select %p636, %s41, 1
        %s638 = smul.addr %s637, 8
        %s639 = scalar_lea.vmem %s0, %s638
        %p640 = pneg %p70
        %p641 = pneg %p67
        %p642 = scmp.lt.s32.totalorder %s41, 1
        %s643 = scalar_select %p642, %s41, 1
        %s644 = scalar_lea.vmem %s1, %s643
        %p645 = pneg %p96
        %p646 = pneg %p93
        %p647 = scmp.lt.s32.totalorder %s42, 3
        %s648 = scalar_select %p647, %s42, 3
        %s649 = smul.addr %s648, 4
        %s650 = smul.addr %s649, 4
        %s651 = scalar_lea.vmem %s2, %s650
        %p652 = pneg %p122
        %p653 = pneg %p119
        %p654 = scmp.lt.s32.totalorder %s42, 3
        %s655 = scalar_select %p654, %s42, 3
        %s656 = scalar_lea.vmem %s3, %s655
        %p657 = pneg %p148
        %p658 = pneg %p145
        %p659 = scmp.lt.s32.totalorder %s42, 3
        %s660 = scalar_select %p659, %s42, 3
        %s661 = smul.addr %s660, 4
        %s662 = smul.addr %s661, 4
        %s663 = scalar_lea.vmem %s4, %s662
        %p664 = pneg %p174
        %p665 = pneg %p171
        %p666 = scmp.lt.s32.totalorder %s42, 3
        %s667 = scalar_select %p666, %s42, 3
        %s668 = scalar_lea.vmem %s5, %s667
        %p669 = pneg %p200
        %p670 = pneg %p197
        %p671 = scmp.lt.s32.totalorder %s42, 3
        %s672 = scalar_select %p671, %s42, 3
        %s673 = smul.addr %s672, 4
        %s674 = smul.addr %s673, 4
        %s675 = scalar_lea.vmem %s6, %s674
        %p676 = pneg %p226
        %p677 = pneg %p223
        %p678 = scmp.lt.s32.totalorder %s42, 3
        %s679 = scalar_select %p678, %s42, 3
        %s680 = scalar_lea.vmem %s7, %s679
        %p681 = pneg %p252
        %p682 = pneg %p249
        %p683 = scmp.lt.s32.totalorder %s42, 3
        %s684 = scalar_select %p683, %s42, 3
        %s685 = smul.addr %s684, 4
        %s686 = scalar_lea.vmem %s8, %s685
        %p687 = pneg %p278
        %p688 = pneg %p275
        %p689 = pneg %p299
        %p690 = pneg %p296
        %p691 = pneg %p320
        %p692 = pneg %p317
        %p693 = pneg %p341
        %p694 = pneg %p338
        %p695 = pneg %p362
        %p696 = pneg %p359
        %p697 = pneg %p383
        %p698 = pneg %p380
        %p699 = pneg %p404
        %p700 = pneg %p401
        %p701 = pneg %p425
        %p702 = pneg %p422
        %p703 = pneg %p446
        %p704 = pneg %p443
        %p705 = pneg %p467
        %p706 = pneg %p464
        %p707 = pneg %p493
        %p708 = pneg %p490
        %s709 = sand.u32 %s480, 1
        %s710 = scalar_lea.sflag [#allocation4], %s709
        %s711 = sand.u32 %s480, 1
        %s712 = smul.addr %s711, 8
        %s713 = scalar_lea.vmem [#allocation3], %s712
        %p714 = pneg %p521
        %p715 = pneg %p518
        %s716 = sand.u32 %s508, 1
        %s717 = scalar_lea.sflag [#allocation6], %s716
        %s718 = sand.u32 %s508, 1
        %s719 = smul.addr %s718, 8
        %s720 = scalar_lea.vmem [#allocation5], %s719
        %p721 = scmp.lt.s32.totalorder %s41, 1
        %s722 = scalar_select %p721, %s41, 1
        %s723 = smul.addr %s722, 8
        %s724 = scalar_lea.vmem %s0, %s723
        %p725 = scmp.lt.s32.totalorder %s41, 1
        %s726 = scalar_select %p725, %s41, 1
        %s727 = scalar_lea.vmem %s1, %s726
        %p728 = scmp.lt.s32.totalorder %s42, 3
        %s729 = scalar_select %p728, %s42, 3
        %s730 = smul.addr %s729, 4
        %s731 = smul.addr %s730, 4
        %s732 = scalar_lea.vmem %s2, %s731
        %p733 = scmp.lt.s32.totalorder %s42, 3
        %s734 = scalar_select %p733, %s42, 3
        %s735 = scalar_lea.vmem %s3, %s734
        %p736 = scmp.lt.s32.totalorder %s42, 3
        %s737 = scalar_select %p736, %s42, 3
        %s738 = smul.addr %s737, 4
        %s739 = smul.addr %s738, 4
        %s740 = scalar_lea.vmem %s4, %s739
        %p741 = scmp.lt.s32.totalorder %s42, 3
        %s742 = scalar_select %p741, %s42, 3
        %s743 = scalar_lea.vmem %s5, %s742
        %p744 = scmp.lt.s32.totalorder %s42, 3
        %s745 = scalar_select %p744, %s42, 3
        %s746 = smul.addr %s745, 4
        %s747 = smul.addr %s746, 4
        %s748 = scalar_lea.vmem %s6, %s747
        %p749 = scmp.lt.s32.totalorder %s42, 3
        %s750 = scalar_select %p749, %s42, 3
        %s751 = scalar_lea.vmem %s7, %s750
        %p752 = scmp.lt.s32.totalorder %s42, 3
        %s753 = scalar_select %p752, %s42, 3
        %s754 = smul.addr %s753, 4
        %s755 = scalar_lea.vmem %s8, %s754
        %p757 = scmp.eq.s32.totalorder %s42, 0
        // Predicated region
        $region93: #{tpu_custom_call.1} parent=91 // pred_check
          %p758 = pneg %p757
        $region94: #{tpu_custom_call.1} parent=91 // pred_check_branch
          %760 = sbr.rel (%p758) target = $region96
        $region95: #{tpu_custom_call.1} parent=91 // pred_region
          %vm761 = vcmask 261120
          %762 = vst.msk [vmem:[#allocation2] sm:$0xff] %vm761, 0.0
        $region96: #{tpu_custom_call.1} parent=91 // pred_fallthru
          _
        %v763 = vld [vmem:[%s724] sm:$0xff]
        %v764 = vpack.c.bf16 %v763, %v763
        %v765 = vld [vmem:[%s727] sm:$0x1]
        %v766 = vld [vmem:[%s732] sm:$0xf]
        %v767 = vld [vmem:[%s732 + $0x4] sm:$0xf]
        %v768 = vld [vmem:[%s732 + $0x8] sm:$0xf]
        %v769 = vld [vmem:[%s732 + $0xc] sm:$0xf]
        %v770 = vld [vmem:[%s735] sm:$0x1]
        %v772 = vperm.slane %v770, 0
        %v778 = vunpack.c.l.b16 %v766
        %v779 = vunpack.c.l.b16 %v767
        %v780 = vunpack.c.l.b16 %v768
        %v781 = vunpack.c.l.b16 %v769
        %v782 = vpack.c.b16 %v779, %v778
        %v783 = vpack.c.b16 %v781, %v780
        %vm786 = vcmask 261120
        %v788 = vsel %vm786, %v764, 0
        %790 = vmatpush.bf16.msra.mxu0 0
        %791 = vmatpush.bf16.msra.mxu0 0
        %792 = vmatpush.bf16.msra.mxu0 0
        %793 = vmatpush.bf16.msra.mxu0 0
        %794 = vmatpush.bf16.msra.mxu0 0
        %795 = vmatpush.bf16.msra.mxu0 0
        %796 = vmatpush.bf16.msra.mxu0 %v783
        %797 = vmatpush.bf16.msra.mxu0 %v782
        %798 = vmatmul.bf16.gmra.mxu0 %v788
        %v799 = vpop.f32.mrf.mxu0
        %v800 = vadd.f32 %v772, %v799
        %v801 = vpop.f32.mrf.mxu0
        %802 = vdwg.mxu0
        %v803 = vld [vmem:[%s740] sm:$0xf]
        %v804 = vld [vmem:[%s740 + $0x4] sm:$0xf]
        %v805 = vld [vmem:[%s740 + $0x8] sm:$0xf]
        %v806 = vld [vmem:[%s740 + $0xc] sm:$0xf]
        %v807 = vld [vmem:[%s743] sm:$0x1]
        %v809 = vperm.slane %v807, 0
        %v815 = vunpack.c.l.b16 %v803
        %v816 = vunpack.c.l.b16 %v804
        %v817 = vunpack.c.l.b16 %v805
        %v818 = vunpack.c.l.b16 %v806
        %v819 = vpack.c.b16 %v816, %v815
        %v820 = vpack.c.b16 %v818, %v817
        %823 = vmatpush.bf16.msra.mxu0 0
        %824 = vmatpush.bf16.msra.mxu0 0
        %825 = vmatpush.bf16.msra.mxu0 0
        %826 = vmatpush.bf16.msra.mxu0 0
        %827 = vmatpush.bf16.msra.mxu0 0
        %828 = vmatpush.bf16.msra.mxu0 0
        %829 = vmatpush.bf16.msra.mxu0 %v820
        %830 = vmatpush.bf16.msra.mxu0 %v819
        %831 = vmatmul.bf16.gmra.mxu0 %v788
        %v832 = vpop.f32.mrf.mxu0
        %v833 = vadd.f32 %v809, %v832
        %v834 = vpop.f32.mrf.mxu0
        %835 = vdwg.mxu0
        %v836 = vld [vmem:[%s748] sm:$0xf]
        %v837 = vld [vmem:[%s748 + $0x4] sm:$0xf]
        %v838 = vld [vmem:[%s748 + $0x8] sm:$0xf]
        %v839 = vld [vmem:[%s748 + $0xc] sm:$0xf]
        %v840 = vld [vmem:[%s751] sm:$0x1]
        %v842 = vperm.slane %v840, 0
        %v848 = vunpack.c.l.b16 %v836
        %v849 = vunpack.c.l.b16 %v837
        %v850 = vunpack.c.l.b16 %v838
        %v851 = vunpack.c.l.b16 %v839
        %v852 = vpack.c.b16 %v849, %v848
        %v853 = vpack.c.b16 %v851, %v850
        %856 = vmatpush.bf16.msra.mxu0 0
        %857 = vmatpush.bf16.msra.mxu0 0
        %858 = vmatpush.bf16.msra.mxu0 0
        %859 = vmatpush.bf16.msra.mxu0 0
        %860 = vmatpush.bf16.msra.mxu0 0
        %861 = vmatpush.bf16.msra.mxu0 0
        %862 = vmatpush.bf16.msra.mxu0 %v853
        %863 = vmatpush.bf16.msra.mxu0 %v852
        %864 = vmatmul.bf16.gmra.mxu0 %v788
        %v865 = vpop.f32.mrf.mxu0
        %v866 = vadd.f32 %v842, %v865
        %v867 = vpop.f32.mrf.mxu0
        %868 = vdwg.mxu0
        %v869 = vpack.c.bf16 %v800, %v800
        %v870 = vpack.c.bf16 %v833, %v833
        %vm871 = vcmask 64512
        %v873 = vsel %vm871, %v869, 0
        %v876 = vsel %vm871, %v870, 0
        %878 = vmatpush.bf16.xpose.msra.mxu0 0
        %879 = vmatpush.bf16.xpose.msra.mxu0 0
        %880 = vmatpush.bf16.xpose.msra.mxu0 0
        %881 = vmatpush.bf16.xpose.msra.mxu0 0
        %882 = vmatpush.bf16.xpose.msra.mxu0 0
        %883 = vmatpush.bf16.xpose.msra.mxu0 0
        %884 = vmatpush.bf16.xpose.msra.mxu0 0
        %885 = vmatpush.bf16.xpose.msra.mxu0 %v876
        %886 = vmatmul.bf16.gmra.mxu0 %v873
        %v887 = vpop.f32.mrf.mxu0
        %v888 = vadd.f32 0.0, %v887
        %v889 = vpop.f32.mrf.mxu0
        %890 = vdwg.mxu0
        %v891 = vmul.f32 %v888, 0.35355338
        %v893 = vperm.slane %v765, 0
        %v895 = vadd.f32 %v891, %v893
        %v896 = vsel %vm871, %v895, -inf
        %897 = vmax.xlane.f32.xlu0 %v896
        %v898 = vpop.xlane.xlu0 %897
        %v899 = vsub.f32 %v895, %v898
        %v900 = vmul.f32 %v899, 1.442695
        %v901 = vpow.pop %v900
        %v902 = vsel %vm871, %v901, 0.0
        %903 = vadd.xlane.f32.xlu0 %v902
        %v904 = vpop.xlane.xlu0 %903
        %v905 = vrcp.pop %v904
        %v906 = vmul.f32 %v901, %v905
        %907 = vst.msk [vmem:[%s720] sm:$0xff] %vm871, %v906
        %v908 = vpack.c.bf16 %v906, %v906
        %v909 = vpack.c.bf16 %v866, %v866
        %v911 = vsel %vm871, %v908, 0
        %vm913 = vcmask 1043456
        %v915 = vsel %vm913, %v909, 0
        %917 = vmatpush.bf16.msra.mxu0 0
        %918 = vmatpush.bf16.msra.mxu0 0
        %919 = vmatpush.bf16.msra.mxu0 0
        %920 = vmatpush.bf16.msra.mxu0 0
        %921 = vmatpush.bf16.msra.mxu0 0
        %922 = vmatpush.bf16.msra.mxu0 0
        %923 = vmatpush.bf16.msra.mxu0 0
        %924 = vmatpush.bf16.msra.mxu0 %v915
        %925 = vmatmul.bf16.gmra.mxu0 %v911
        %v926 = vpop.f32.mrf.mxu0
        %v927 = vadd.f32 0.0, %v926
        %v928 = vpop.f32.mrf.mxu0
        %929 = vdwg.mxu0
        %v930 = vld [vmem:[#allocation2] sm:$0xff]
        %v931 = vpack.c.bf16 %v927, %v927
        %v932 = vld [vmem:[%s755] sm:$0xf]
        %v934 = vsel %vm871, %v931, 0
        %v937 = vsel %vm913, %v932, 0
        %939 = vmatpush.bf16.msra.mxu0 0
        %940 = vmatpush.bf16.msra.mxu0 0
        %941 = vmatpush.bf16.msra.mxu0 0
        %942 = vmatpush.bf16.msra.mxu0 0
        %943 = vmatpush.bf16.msra.mxu0 0
        %944 = vmatpush.bf16.msra.mxu0 0
        %945 = vmatpush.bf16.msra.mxu0 0
        %946 = vmatpush.bf16.msra.mxu0 %v937
        %947 = vmatmul.bf16.gmra.mxu0 %v934
        %v948 = vpop.f32.mrf.mxu0
        %v949 = vadd.f32 0.0, %v948
        %v950 = vpop.f32.mrf.mxu0
        %951 = vdwg.mxu0
        %v952 = vadd.f32 %v930, %v949
        %953 = vst.msk [vmem:[#allocation2] sm:$0xff] %vm786, %v952
        %p954 = scmp.eq.s32.totalorder %s42, 3
        // Predicated region
        $region97: #{tpu_custom_call.1} parent=91 // pred_check
          %p955 = pneg %p954
        $region98: #{tpu_custom_call.1} parent=91 // pred_check_branch
          %957 = sbr.rel (%p955) target = $region100
        $region99: #{tpu_custom_call.1} parent=91 // pred_region
          %v958 = vld [vmem:[#allocation2] sm:$0xff]
          %v959 = vld [vmem:[%s9] sm:$0x1]
          %v961 = vperm.slane %v959, 0
          %v963 = vadd.f32 %v958, %v961
          %v964 = vadd.f32 %v963, %v763
          %v965 = vsel %vm786, %v964, 0.0
          %966 = vadd.xlane.f32.xlu0 %v965
          %v967 = vpop.xlane.xlu0 %966
          %v968 = vrcp.pop 32.0
          %v969 = vmul.f32 32.0, %v968
          %v970 = vsub.f32 1.0, %v969
          %v971 = vmul.f32 %v968, %v970
          %v972 = vadd.f32 %v968, %v971
          %vm973 = vweird.f32 %v968
          %v974 = vsel %vm973, %v968, %v972
          %v975 = vmul.f32 %v967, %v974
          %v976 = vsub.f32 %v964, %v975
          %v977 = vmul.f32 %v976, %v976
          %v978 = vsel %vm786, %v977, 0.0
          %979 = vadd.xlane.f32.xlu0 %v978
          %v980 = vpop.xlane.xlu0 %979
          %v981 = vmul.f32 %v980, %v974
          %v982 = vadd.f32 %v981, 1e-12
          %v983 = vrsqrt.pop %v982
          %v984 = vmul.f32 %v983, %v982
          %v985 = vmul.f32 %v984, %v983
          %v986 = vmul.f32 0.5, %v985
          %v987 = vsub.f32 1.5, %v986
          %v988 = vmul.f32 %v983, %v987
          %vm989 = vweird.f32 %v982
          %vm990 = vweird.f32 %v983
          %vm991 = vmor %vm989, %vm990
          %v992 = vsel %vm991, %v983, %v988
          %v993 = vmul.f32 %v976, %v992
          %v994 = vld [vmem:[%s10] sm:$0x1]
          %v996 = vperm.slane %v994, 0
          %v998 = vmul.f32 %v993, %v996
          %v999 = vld [vmem:[%s11] sm:$0x1]
          %v1001 = vperm.slane %v999, 0
          %v1003 = vadd.f32 %v998, %v1001
          %v1004 = vpack.c.bf16 %v1003, %v1003
          %v1005 = vld [vmem:[%s12] sm:$0xf]
          %v1006 = vld [vmem:[%s12 + $0x4] sm:$0xf]
          %v1007 = vld [vmem:[%s12 + $0x8] sm:$0xf]
          %v1008 = vld [vmem:[%s12 + $0xc] sm:$0xf]
          %v1009 = vld [vmem:[%s13] sm:$0x1]
          %v1011 = vperm.slane %v1009, 0
          %v1017 = vunpack.c.l.b16 %v1005
          %v1018 = vunpack.c.l.b16 %v1006
          %v1019 = vunpack.c.l.b16 %v1007
          %v1020 = vunpack.c.l.b16 %v1008
          %v1021 = vpack.c.b16 %v1018, %v1017
          %v1022 = vpack.c.b16 %v1020, %v1019
          %v1026 = vsel %vm786, %v1004, 0
          %1028 = vmatpush.bf16.msra.mxu0 0
          %1029 = vmatpush.bf16.msra.mxu0 0
          %1030 = vmatpush.bf16.msra.mxu0 0
          %1031 = vmatpush.bf16.msra.mxu0 0
          %1032 = vmatpush.bf16.msra.mxu0 0
          %1033 = vmatpush.bf16.msra.mxu0 0
          %1034 = vmatpush.bf16.msra.mxu0 %v1022
          %1035 = vmatpush.bf16.msra.mxu0 %v1021
          %1036 = vmatmul.bf16.gmra.mxu0 %v1026
          %v1037 = vpop.f32.mrf.mxu0
          %v1038 = vadd.f32 %v1011, %v1037
          %v1039 = vpop.f32.mrf.mxu0
          %1040 = vdwg.mxu0
          %v1041 = vmul.f32 %v1038, 0.5
          %v1042 = vmul.f32 %v1038, 0.70710677
          %v1043 = vand.u32 2147483647, %v1042
          %v1044 = vmul.f32 %v1043, 0.3275911
          %v1045 = vadd.f32 %v1044, 1.0
          %v1046 = vrcp.pop %v1045
          %v1047 = vmul.f32 %v1045, %v1046
          %v1048 = vsub.f32 1.0, %v1047
          %v1049 = vmul.f32 %v1046, %v1048
          %v1050 = vadd.f32 %v1046, %v1049
          %vm1051 = vweird.f32 %v1045
          %vm1052 = vweird.f32 %v1046
          %vm1053 = vmor %vm1051, %vm1052
          %v1054 = vsel %vm1053, %v1046, %v1050
          %v1055 = vand.u32 2147483647, %v1045
          %vm1056 = vcmp.eq.f32.partialorder %v1055, 8.507059e+37
          %v1057 = vand.u32 %v1045, 2147483648
          %v1058 = vor.u32 1.1754944e-38, %v1057
          %v1059 = vsel %vm1056, %v1058, %v1054
          %v1060 = vmul.f32 1.0, %v1059
          %v1061 = vmul.f32 %v1060, 1.0614054
          %v1062 = vadd.f32 %v1061, -1.4531521
          %v1063 = vmul.f32 %v1062, %v1060
          %v1064 = vadd.f32 %v1063, 1.4214138
          %v1065 = vmul.f32 %v1064, %v1060
          %v1066 = vadd.f32 %v1065, -0.28449672
          %v1067 = vmul.f32 %v1066, %v1060
          %v1068 = vadd.f32 %v1067, 0.2548296
          %v1069 = vmul.f32 %v1068, %v1060
          %v1070 = vsub.f32 0.0, %v1043
          %v1071 = vmul.f32 %v1070, %v1043
          %v1072 = vmul.f32 %v1071, 1.442695
          %v1073 = vpow.pop %v1072
          %v1074 = vmul.f32 %v1069, %v1073
          %v1075 = vsub.f32 1.0, %v1074
          %vm1076 = vcmp.ge.f32.partialorder %v1042, 0.0
          %v1077 = vsub.f32 0.0, %v1075
          %v1078 = vsel %vm1076, %v1075, %v1077
          %v1079 = vadd.f32 %v1078, 1.0
          %v1080 = vmul.f32 %v1041, %v1079
          %v1081 = vpack.c.bf16 %v1080, %v1080
          %v1082 = vld [vmem:[%s14] sm:$0xf]
          %v1083 = vld [vmem:[%s14 + $0x4] sm:$0xf]
          %v1084 = vld [vmem:[%s14 + $0x8] sm:$0xf]
          %v1085 = vld [vmem:[%s14 + $0xc] sm:$0xf]
          %v1086 = vld [vmem:[%s14 + $0x10] sm:$0xf]
          %v1087 = vld [vmem:[%s14 + $0x14] sm:$0xf]
          %v1088 = vld [vmem:[%s14 + $0x18] sm:$0xf]
          %v1089 = vld [vmem:[%s14 + $0x1c] sm:$0xf]
          %v1090 = vld [vmem:[%s15] sm:$0x1]
          %v1092 = vperm.slane %v1090, 0
          %v1102 = vunpack.c.l.b16 %v1082
          %v1103 = vunpack.c.l.b16 %v1083
          %v1104 = vunpack.c.l.b16 %v1084
          %v1105 = vunpack.c.l.b16 %v1085
          %v1106 = vunpack.c.l.b16 %v1086
          %v1107 = vunpack.c.l.b16 %v1087
          %v1108 = vunpack.c.l.b16 %v1088
          %v1109 = vunpack.c.l.b16 %v1089
          %v1110 = vpack.c.b16 %v1103, %v1102
          %v1111 = vpack.c.b16 %v1105, %v1104
          %v1112 = vpack.c.b16 %v1107, %v1106
          %v1113 = vpack.c.b16 %v1109, %v1108
          %vm1118 = vcmask 523264
          %v1120 = vsel %vm1118, %v1081, 0
          %1122 = vmatpush.bf16.msra.mxu0 0
          %1123 = vmatpush.bf16.msra.mxu0 0
          %1124 = vmatpush.bf16.msra.mxu0 0
          %1125 = vmatpush.bf16.msra.mxu0 0
          %1126 = vmatpush.bf16.msra.mxu0 %v1113
          %1127 = vmatpush.bf16.msra.mxu0 %v1112
          %1128 = vmatpush.bf16.msra.mxu0 %v1111
          %1129 = vmatpush.bf16.msra.mxu0 %v1110
          %1130 = vmatmul.bf16.gmra.mxu0 %v1120
          %v1131 = vpop.f32.mrf.mxu0
          %v1132 = vadd.f32 %v1092, %v1131
          %v1133 = vpop.f32.mrf.mxu0
          %1134 = vdwg.mxu0
          %v1135 = vadd.f32 %v1132, %v1003
          %v1136 = vsel %vm786, %v1135, 0.0
          %1137 = vadd.xlane.f32.xlu0 %v1136
          %v1138 = vpop.xlane.xlu0 %1137
          %v1139 = vmul.f32 %v1138, %v974
          %v1140 = vsub.f32 %v1135, %v1139
          %v1141 = vmul.f32 %v1140, %v1140
          %v1142 = vsel %vm786, %v1141, 0.0
          %1143 = vadd.xlane.f32.xlu0 %v1142
          %v1144 = vpop.xlane.xlu0 %1143
          %v1145 = vmul.f32 %v1144, %v974
          %v1146 = vadd.f32 %v1145, 1e-12
          %v1147 = vrsqrt.pop %v1146
          %v1148 = vmul.f32 %v1147, %v1146
          %v1149 = vmul.f32 %v1148, %v1147
          %v1150 = vmul.f32 0.5, %v1149
          %v1151 = vsub.f32 1.5, %v1150
          %v1152 = vmul.f32 %v1147, %v1151
          %vm1153 = vweird.f32 %v1146
          %vm1154 = vweird.f32 %v1147
          %vm1155 = vmor %vm1153, %vm1154
          %v1156 = vsel %vm1155, %v1147, %v1152
          %v1157 = vmul.f32 %v1140, %v1156
          %v1158 = vld [vmem:[%s16] sm:$0x1]
          %v1160 = vperm.slane %v1158, 0
          %v1162 = vmul.f32 %v1157, %v1160
          %v1163 = vld [vmem:[%s17] sm:$0x1]
          %v1165 = vperm.slane %v1163, 0
          %v1167 = vadd.f32 %v1162, %v1165
          %1168 = vst.msk [vmem:[%s713] sm:$0xff] %vm786, %v1167
        $region100: #{tpu_custom_call.1} parent=91 // pred_fallthru
          _
        %s1169 = sand.u32 %s480, 1
        %s1170 = scalar_lea.sflag [#allocation4], %s1169
        %s1171 = sand.u32 %s480, 1
        %s1172 = smul.addr %s1171, 8
        %s1173 = scalar_lea.vmem [#allocation3], %s1172
        %s1174 = sand.u32 %s508, 1
        %s1175 = scalar_lea.sflag [#allocation6], %s1174
        %s1176 = sand.u32 %s508, 1
        %s1177 = smul.addr %s1176, 8
        %s1178 = scalar_lea.vmem [#allocation5], %s1177
        // Predicated region
        $region101: #{tpu_custom_call.1} parent=91 // pred_check
          %p1179 = pneg %p490
        $region102: #{tpu_custom_call.1} parent=91 // pred_check_branch
          %1181 = sbr.rel (%p1179) target = $region104
        $region103: #{tpu_custom_call.1} parent=91 // pred_region
          %1183 = vsyncadd %s1170, 0
          %s1184 = smul.addr %s41, 8
          %s1185 = scalar_lea.hbm %s18, %s1184
          %s1187 = sshll.u32 %s1173, 4
          %s1188 = int_to_ptr.vmem [resolvable:$true] %s1187
          %s1189 = sshll.u32 %s1185, 4
          %s1190 = int_to_ptr.hbm [resolvable:$true] %s1189
          %1192 = dma.vmem_to_hbm [thread:$0]  %s1188, 128, %s1190, %s1170
        $region104: #{tpu_custom_call.1} parent=91 // pred_fallthru
          _
        // Predicated region
        $region105: #{tpu_custom_call.1} parent=91 // pred_check
          %p1193 = pneg %p518
        $region106: #{tpu_custom_call.1} parent=91 // pred_check_branch
          %1195 = sbr.rel (%p1193) target = $region108
        $region107: #{tpu_custom_call.1} parent=91 // pred_region
          %1197 = vsyncadd %s1175, 0
          %s1198 = smul.addr %s41, 4
          %s1199 = sadd.s32 %s42, %s1198
          %s1200 = smul.addr %s1199, 8
          %s1201 = scalar_lea.hbm %s19, %s1200
          %s1203 = sshll.u32 %s1178, 4
          %s1204 = int_to_ptr.vmem [resolvable:$true] %s1203
          %s1205 = sshll.u32 %s1201, 4
          %s1206 = int_to_ptr.hbm [resolvable:$true] %s1205
          %1208 = dma.vmem_to_hbm [thread:$0]  %s1204, 128, %s1206, %s1175
        $region108: #{tpu_custom_call.1} parent=91 // pred_fallthru
          _
      $region92: #{tpu_custom_call.1} parent=5 // pred_fallthru
        _
      %p1209 = scmp.le.s32.totalorder 2, %s32
      // Predicated region
      $region109: #{tpu_custom_call.1} parent=5 // pred_check
        %p1210 = pneg %p1209
      $region110: #{tpu_custom_call.1} parent=5 // pred_check_branch
        %1212 = sbr.rel (%p1210) target = $region112
      $region111: #{tpu_custom_call.1} parent=5 // pred_region
        %s1213 = ssub.s32 %s32, 2
        // Predicated region
        $region113: #{tpu_custom_call.1} parent=111 // pred_check
          %p1214 = pneg %p496
        $region114: #{tpu_custom_call.1} parent=111 // pred_check_branch
          %1216 = sbr.rel (%p1214) target = $region116
        $region115: #{tpu_custom_call.1} parent=111 // pred_region
          %s1217 = sand.u32 %s481, 1
          %s1218 = scalar_lea.sflag [#allocation4], %s1217
          %s1219 = sand.u32 %s481, 1
          %s1220 = smul.addr %s1219, 8
          %s1221 = scalar_lea.vmem [#allocation3], %s1220
          %1223 = dma.done %s1218, 128
        $region116: #{tpu_custom_call.1} parent=111 // pred_fallthru
          _
        // Predicated region
        $region117: #{tpu_custom_call.1} parent=111 // pred_check
          %p1224 = pneg %p524
        $region118: #{tpu_custom_call.1} parent=111 // pred_check_branch
          %1226 = sbr.rel (%p1224) target = $region120
        $region119: #{tpu_custom_call.1} parent=111 // pred_region
          %s1227 = sand.u32 %s509, 1
          %s1228 = scalar_lea.sflag [#allocation6], %s1227
          %s1229 = sand.u32 %s509, 1
          %s1230 = smul.addr %s1229, 8
          %s1231 = scalar_lea.vmem [#allocation5], %s1230
          %1233 = dma.done %s1228, 128
        $region120: #{tpu_custom_call.1} parent=111 // pred_fallthru
          _
      $region112: #{tpu_custom_call.1} parent=5 // pred_fallthru
        _
    $region6: #{tpu_custom_call.1} parent=1 // loop_footer
      %s36 = sadd.s32 1, %s32
    $region7: #{tpu_custom_call.1} parent=1 // loop_footer_branch
      %31 = sbr.rel target = $region3
    $region8: #{tpu_custom_call.1} parent=1 // loop_exit
      _
    %1234 = vsyncpa [#allocation4], 1
    %s1235 = scalar_lea.sflag [#allocation4], 1
    %1236 = vsyncpa %s1235, 1
    %1237 = vsyncpa [#allocation6], 1
    %s1238 = scalar_lea.sflag [#allocation6], 1
    %1239 = vsyncpa %s1238, 1

</llo_original>
